<compile_context>
chip_gen: v6e
topology: v6e:2x2x1
jax: 0.10.0
libtpu: 0.0.40
codegen_flags: <defaults>
</compile_context>

<pallas_src>
import math
from functools import partial

import jax
import jax.numpy as jnp
from jax.experimental import pallas as pl
from jax.experimental.pallas import tpu as pltpu


def _mha_kernel(vl_ref,                              # VMEM: [Bt*heads, 1, 1] int32 (per-head valid lens)
                q_ref, k_ref, v_ref,                 # VMEM bf16: [Bt*Q, qs], [Bt*K, ks], [Bt*K, vs]
                wq_ref, wk_ref, wv_ref, wo_ref,      # VMEM bf16: full weights ([in, H] / [H, H])
                out_ref,                             # VMEM fp32: [Bt*Q, H]
                ctx_ref,                             # VMEM scratch bf16: [Bt*Q, H]
                *, num_heads, block_b):
    f32 = jnp.float32
    bq = q_ref.shape[0]                  # block_b * num_queries
    bk = k_ref.shape[0]                  # block_b * num_kvs
    H = wq_ref.shape[1]
    nq = bq // block_b
    nk = bk // block_b
    dh = H // num_heads
    bh = block_b * num_heads
    scale = 1.0 / math.sqrt(dh)

    # ---- fused input projections: one MXU matmul each (bf16 operands, fp32 acc) ----
    qp = jnp.dot(q_ref[...], wq_ref[...], preferred_element_type=f32)   # [bq, H]
    kp = jnp.dot(k_ref[...], wk_ref[...], preferred_element_type=f32)   # [bk, H]
    vp = jnp.dot(v_ref[...], wv_ref[...], preferred_element_type=f32)   # [bk, H]

    # 1/sqrt(dh) applied to the small [bq, H] projection (not the [bh,nq,nk] scores).
    qp = (qp * scale).astype(q_ref.dtype)
    kp = kp.astype(k_ref.dtype)
    vp = vp.astype(v_ref.dtype)

    # ---- transpose_qkv: [Bt*n, H] -> [(Bt*heads), n, dh] head-major batch ----
    # Kept as lane slices + stack: the equivalent jnp.transpose((0,2,1,3)) is not a
    # reliably supported Mosaic relayout; the data movement is the same either way.
    def to_heads(x, n):
        x3 = x.reshape(block_b, n, H)
        parts = [x3[:, :, h * dh:(h + 1) * dh] for h in range(num_heads)]   # [Bt, n, dh]
        return jnp.stack(parts, axis=1).reshape(bh, n, dh)                  # [(b,h), n, dh]

    qh = to_heads(qp, nq)
    kh = to_heads(kp, nk)
    vh = to_heads(vp, nk)

    # ---- batched scores over (batch, head); bf16 MXU, fp32 accumulation ----
    scores = jnp.einsum('bqd,bkd->bqk', qh, kh,
                        preferred_element_type=f32)                         # [bh, nq, nk]

    # ---- masked softmax: ONE vectorized where (same -1e6 fill as masked_softmax) ----
    col = jax.lax.broadcasted_iota(jnp.int32, scores.shape, 2)
    scores = jnp.where(col < vl_ref[...], scores, -1000000.0)
    scores = scores - jnp.max(scores, axis=-1, keepdims=True)
    p = jnp.exp(scores)
    p = p * pl.reciprocal(jnp.sum(p, axis=-1, keepdims=True), approx=True)

    # ---- attention * V, batched over (batch, head) ----
    ctx = jnp.einsum('bqk,bkd->bqd', p.astype(v_ref.dtype), vh,
                     preferred_element_type=f32)                            # [bh, nq, dh]

    # ---- transpose_output into a lane-sliced bf16 scratch, then ONE fused W_o matmul ----
    # (For real configs dh % 128 == 0, so these stores are unmasked full-lane vst.)
    ctx4 = ctx.reshape(block_b, num_heads, nq, dh)
    for h in range(num_heads):
        ctx_ref[:, h * dh:(h + 1) * dh] = ctx4[:, h].reshape(bq, dh).astype(ctx_ref.dtype)
    out_ref[...] = jnp.dot(ctx_ref[...], wo_ref[...],
                           preferred_element_type=f32).astype(out_ref.dtype)


def multi_head_attention(queries, keys, values, valid_lens, params, num_heads,
                         block_b=None):
    """queries:[B,Q,qs] keys:[B,K,ks] values:[B,K,vs] valid_lens:[B] int -> [B,Q,H]."""
    wq, wk, wv, wo = params
    B, nq, qs = queries.shape
    _, nk, ks = keys.shape
    vs = values.shape[-1]
    H = wq.shape[1]
    assert H % num_heads == 0

    if block_b is None:
        block_b = B                      # demo: whole batch in one grid step
    assert B % block_b == 0
    # Sub-batch tiles must keep the (8,128) block rule on the folded (batch,seq) rows.
    assert block_b == B or block_b % 8 == 0, \
        "block_b < B requires block_b to be a multiple of 8"
    n_tiles = B // block_b

    compute_dtype = jnp.bfloat16
    # Fold (batch, seq) into rows -> lane-dense 2-D slabs; cast matmul operands to bf16.
    q2 = queries.reshape(B * nq, qs).astype(compute_dtype)
    k2 = keys.reshape(B * nk, ks).astype(compute_dtype)
    v2 = values.reshape(B * nk, vs).astype(compute_dtype)
    wq_b = wq.astype(compute_dtype)
    wk_b = wk.astype(compute_dtype)
    wv_b = wv.astype(compute_dtype)
    wo_b = wo.astype(compute_dtype)
    # torch.repeat_interleave(valid_lens, num_heads): one valid length per (batch, head),
    # shaped so the kernel can broadcast it straight against the [bh, nq, nk] scores.
    vl = jnp.repeat(valid_lens.astype(jnp.int32), num_heads).reshape(B * num_heads, 1, 1)

    # VMEM budget from actual tile sizes (double-buffered I/O + weights + fp32
    # intermediates), clamped to the smallest per-core VMEM (v7x: 64 MiB).
    io_bytes = 2 * 2 * (block_b * nq * qs + block_b * nk * (ks + vs)) \
        + 2 * 4 * block_b * nq * H + 2 * 4 * block_b * num_heads
    w_bytes = 2 * 2 * (qs + ks + vs + H) * H
    interm_bytes = 4 * (block_b * num_heads * nq * nk + 3 * block_b * nq * H)
    vmem_limit = int(min(64 << 20,
                         max(2 * (io_bytes + w_bytes + interm_bytes) + (2 << 20),
                             8 << 20)))

    grid_spec = pltpu.PrefetchScalarGridSpec(
        num_scalar_prefetch=0,
        grid=(n_tiles,),
        in_specs=[
            pl.BlockSpec((block_b * num_heads, 1, 1), lambda t: (t, 0, 0)),
            pl.BlockSpec((block_b * nq, qs), lambda t: (t, 0)),
            pl.BlockSpec((block_b * nk, ks), lambda t: (t, 0)),
            pl.BlockSpec((block_b * nk, vs), lambda t: (t, 0)),
            pl.BlockSpec((qs, H), lambda t: (0, 0)),
            pl.BlockSpec((ks, H), lambda t: (0, 0)),
            pl.BlockSpec((vs, H), lambda t: (0, 0)),
            pl.BlockSpec((H, H), lambda t: (0, 0)),
        ],
        out_specs=pl.BlockSpec((block_b * nq, H), lambda t: (t, 0)),
        scratch_shapes=[pltpu.VMEM((block_b * nq, H), compute_dtype)],
    )
    out2 = pl.pallas_call(
        partial(_mha_kernel, num_heads=num_heads, block_b=block_b),
        grid_spec=grid_spec,
        out_shape=jax.ShapeDtypeStruct((B * nq, H), jnp.float32),
        compiler_params=pltpu.CompilerParams(
            dimension_semantics=("parallel",),
            vmem_limit_bytes=vmem_limit),
    )(vl, q2, k2, v2, wq_b, wk_b, wv_b, wo_b)
    return out2.reshape(B, nq, H)


def _reference_mha(queries, keys, values, valid_lens, params, num_heads):
    """Pure-JAX fp32 reference reproducing the PyTorch forward exactly."""
    wq, wk, wv, wo = params
    qp = queries @ wq
    kp = keys @ wk
    vp = values @ wv
    B, nq, H = qp.shape
    nk = kp.shape[1]
    dh = H // num_heads

    def tqkv(x):
        b, n, _ = x.shape
        return x.reshape(b, n, num_heads, dh).transpose(0, 2, 1, 3).reshape(b * num_heads, n, dh)

    qh, kh, vh = tqkv(qp), tqkv(kp), tqkv(vp)
    vl = jnp.repeat(valid_lens, num_heads)
    scores = jnp.einsum('bqd,bkd->bqk', qh, kh) / math.sqrt(dh)
    mask = jnp.arange(nk, dtype=jnp.float32)[None, None, :] < vl.astype(jnp.float32)[:, None, None]
    scores = jnp.where(mask, scores, -1000000.0)
    attn = jax.nn.softmax(scores, axis=-1)
    out = jnp.einsum('bqk,bkd->bqd', attn, vh)
    out = out.reshape(B, num_heads, nq, dh).transpose(0, 2, 1, 3).reshape(B, nq, H)
    return out @ wo


if __name__ == "__main__":
    # Small shapes consistent with the module's forward signature.
    query_size, key_size, value_size = 5, 4, 3
    num_hiddens, num_heads = 32, 4
    batch_size, num_queries, num_kvs = 2, 4, 6

    key = jax.random.PRNGKey(0)
    k0, k1, k2, k3, k4, k5, k6 = jax.random.split(key, 7)

    # Deterministic parameters (stored as [in, out], i.e. pre-transposed nn.Linear weights).
    wq = jax.random.normal(k0, (query_size, num_hiddens), jnp.float32) * 0.1
    wk = jax.random.normal(k1, (key_size, num_hiddens), jnp.float32) * 0.1
    wv = jax.random.normal(k2, (value_size, num_hiddens), jnp.float32) * 0.1
    wo = jax.random.normal(k3, (num_hiddens, num_hiddens), jnp.float32) * 0.1
    params = (wq, wk, wv, wo)

    queries = jax.random.normal(k4, (batch_size, num_queries, query_size), jnp.float32)
    keys = jax.random.normal(k5, (batch_size, num_kvs, key_size), jnp.float32)
    values = jax.random.normal(k6, (batch_size, num_kvs, value_size), jnp.float32)
    valid_lens = jnp.array([3, 2], dtype=jnp.int32)

    out = multi_head_attention(queries, keys, values, valid_lens, params, num_heads)
    out = jax.block_until_ready(out)

    ref = _reference_mha(queries, keys, values, valid_lens, params, num_heads)
    assert out.shape == (batch_size, num_queries, num_hiddens)
    # Tolerance accounts for bf16 matmul operands (fp32 accumulation) and the
    # approx (EUP) reciprocal in the softmax denominator.
    assert jnp.allclose(out, ref, atol=2e-2, rtol=2e-2), "Pallas output mismatch vs reference"

    print("KERNEL_OK")
</pallas_src>

<mosaic_0001>
module attributes {stable_mosaic.version = 11 : i64} {
  func.func @_mha_kernel(%arg0: i32, %arg1: memref<8x1x1xi32, #tpu.memory_space<vmem>>, %arg2: memref<8x5xbf16, #tpu.memory_space<vmem>>, %arg3: memref<12x4xbf16, #tpu.memory_space<vmem>>, %arg4: memref<12x3xbf16, #tpu.memory_space<vmem>>, %arg5: memref<5x32xbf16, #tpu.memory_space<vmem>>, %arg6: memref<4x32xbf16, #tpu.memory_space<vmem>>, %arg7: memref<3x32xbf16, #tpu.memory_space<vmem>>, %arg8: memref<32x32xbf16, #tpu.memory_space<vmem>>, %arg9: memref<8x32xf32, #tpu.memory_space<vmem>>, %arg10: memref<8x32xbf16, #tpu.memory_space<vmem>>) attributes {dimension_semantics = [#tpu.dimension_semantics<parallel>], iteration_bounds = array<i64: 1>, scalar_prefetch = 0 : i64, scratch_operands = 1 : i64, tpu.core_type = #tpu.core_type<tc>, window_params = [{transform_indices = @transform_0, window_bounds = array<i64: 8, 1, 1>}, {transform_indices = @transform_1, window_bounds = array<i64: 8, 5>}, {transform_indices = @transform_2, window_bounds = array<i64: 12, 4>}, {transform_indices = @transform_3, window_bounds = array<i64: 12, 3>}, {pipeline_mode = #tpu.pipeline_mode<synchronous>, transform_indices = @transform_4, window_bounds = array<i64: 5, 32>}, {pipeline_mode = #tpu.pipeline_mode<synchronous>, transform_indices = @transform_5, window_bounds = array<i64: 4, 32>}, {pipeline_mode = #tpu.pipeline_mode<synchronous>, transform_indices = @transform_6, window_bounds = array<i64: 3, 32>}, {pipeline_mode = #tpu.pipeline_mode<synchronous>, transform_indices = @transform_7, window_bounds = array<i64: 32, 32>}, {transform_indices = @transform_8, window_bounds = array<i64: 8, 32>}]} {
    %c0 = arith.constant 0 : index
    %c0_0 = arith.constant 0 : index
    %0 = vector.load %arg2[%c0, %c0_0] : memref<8x5xbf16, #tpu.memory_space<vmem>>, vector<8x5xbf16>
    %c0_1 = arith.constant 0 : index
    %c0_2 = arith.constant 0 : index
    %1 = vector.load %arg5[%c0_1, %c0_2] : memref<5x32xbf16, #tpu.memory_space<vmem>>, vector<5x32xbf16>
    %cst = arith.constant dense<0.000000e+00> : vector<8x32xf32>
    %2 = tpu.matmul %0, %1, %cst {dimension_numbers = #tpu.dot_dimension_numbers<[1], [0], [0], [1], [0, 0, 1, 1], [], []>} : vector<8x5xbf16>, vector<5x32xbf16>, vector<8x32xf32> -> vector<8x32xf32>
    %c0_3 = arith.constant 0 : index
    %c0_4 = arith.constant 0 : index
    %3 = vector.load %arg3[%c0_3, %c0_4] : memref<12x4xbf16, #tpu.memory_space<vmem>>, vector<12x4xbf16>
    %c0_5 = arith.constant 0 : index
    %c0_6 = arith.constant 0 : index
    %4 = vector.load %arg6[%c0_5, %c0_6] : memref<4x32xbf16, #tpu.memory_space<vmem>>, vector<4x32xbf16>
    %cst_7 = arith.constant dense<0.000000e+00> : vector<12x32xf32>
    %5 = tpu.matmul %3, %4, %cst_7 {dimension_numbers = #tpu.dot_dimension_numbers<[1], [0], [0], [1], [0, 0, 1, 1], [], []>} : vector<12x4xbf16>, vector<4x32xbf16>, vector<12x32xf32> -> vector<12x32xf32>
    %c0_8 = arith.constant 0 : index
    %c0_9 = arith.constant 0 : index
    %6 = vector.load %arg4[%c0_8, %c0_9] : memref<12x3xbf16, #tpu.memory_space<vmem>>, vector<12x3xbf16>
    %c0_10 = arith.constant 0 : index
    %c0_11 = arith.constant 0 : index
    %7 = vector.load %arg7[%c0_10, %c0_11] : memref<3x32xbf16, #tpu.memory_space<vmem>>, vector<3x32xbf16>
    %cst_12 = arith.constant dense<0.000000e+00> : vector<12x32xf32>
    %8 = tpu.matmul %6, %7, %cst_12 {dimension_numbers = #tpu.dot_dimension_numbers<[1], [0], [0], [1], [0, 0, 1, 1], [], []>} : vector<12x3xbf16>, vector<3x32xbf16>, vector<12x32xf32> -> vector<12x32xf32>
    %cst_13 = arith.constant 0.353553385 : f32
    %9 = vector.broadcast %cst_13 : f32 to vector<8x32xf32>
    %10 = arith.mulf %2, %9 : vector<8x32xf32>
    %11 = arith.truncf %10 : vector<8x32xf32> to vector<8x32xbf16>
    %12 = arith.truncf %5 : vector<12x32xf32> to vector<12x32xbf16>
    %13 = arith.truncf %8 : vector<12x32xf32> to vector<12x32xbf16>
    %14 = vector.shape_cast %11 : vector<8x32xbf16> to vector<2x4x32xbf16>
    %15 = vector.extract_strided_slice %14 {offsets = [0, 0, 0], sizes = [2, 4, 8], strides = [1, 1, 1]} : vector<2x4x32xbf16> to vector<2x4x8xbf16>
    %16 = vector.extract_strided_slice %14 {offsets = [0, 0, 8], sizes = [2, 4, 8], strides = [1, 1, 1]} : vector<2x4x32xbf16> to vector<2x4x8xbf16>
    %17 = vector.extract_strided_slice %14 {offsets = [0, 0, 16], sizes = [2, 4, 8], strides = [1, 1, 1]} : vector<2x4x32xbf16> to vector<2x4x8xbf16>
    %18 = vector.extract_strided_slice %14 {offsets = [0, 0, 24], sizes = [2, 4, 8], strides = [1, 1, 1]} : vector<2x4x32xbf16> to vector<2x4x8xbf16>
    %19 = vector.shape_cast %15 : vector<2x4x8xbf16> to vector<2x1x4x8xbf16>
    %20 = vector.shape_cast %16 : vector<2x4x8xbf16> to vector<2x1x4x8xbf16>
    %21 = vector.shape_cast %17 : vector<2x4x8xbf16> to vector<2x1x4x8xbf16>
    %22 = vector.shape_cast %18 : vector<2x4x8xbf16> to vector<2x1x4x8xbf16>
    %23 = tpu.concatenate %19, %20, %21, %22 in 1 : vector<2x1x4x8xbf16>, vector<2x1x4x8xbf16>, vector<2x1x4x8xbf16>, vector<2x1x4x8xbf16> -> vector<2x4x4x8xbf16>
    %24 = vector.shape_cast %23 : vector<2x4x4x8xbf16> to vector<8x4x8xbf16>
    %25 = vector.shape_cast %12 : vector<12x32xbf16> to vector<2x6x32xbf16>
    %26 = vector.extract_strided_slice %25 {offsets = [0, 0, 0], sizes = [2, 6, 8], strides = [1, 1, 1]} : vector<2x6x32xbf16> to vector<2x6x8xbf16>
    %27 = vector.extract_strided_slice %25 {offsets = [0, 0, 8], sizes = [2, 6, 8], strides = [1, 1, 1]} : vector<2x6x32xbf16> to vector<2x6x8xbf16>
    %28 = vector.extract_strided_slice %25 {offsets = [0, 0, 16], sizes = [2, 6, 8], strides = [1, 1, 1]} : vector<2x6x32xbf16> to vector<2x6x8xbf16>
    %29 = vector.extract_strided_slice %25 {offsets = [0, 0, 24], sizes = [2, 6, 8], strides = [1, 1, 1]} : vector<2x6x32xbf16> to vector<2x6x8xbf16>
    %30 = vector.shape_cast %26 : vector<2x6x8xbf16> to vector<2x1x6x8xbf16>
    %31 = vector.shape_cast %27 : vector<2x6x8xbf16> to vector<2x1x6x8xbf16>
    %32 = vector.shape_cast %28 : vector<2x6x8xbf16> to vector<2x1x6x8xbf16>
    %33 = vector.shape_cast %29 : vector<2x6x8xbf16> to vector<2x1x6x8xbf16>
    %34 = tpu.concatenate %30, %31, %32, %33 in 1 : vector<2x1x6x8xbf16>, vector<2x1x6x8xbf16>, vector<2x1x6x8xbf16>, vector<2x1x6x8xbf16> -> vector<2x4x6x8xbf16>
    %35 = vector.shape_cast %34 : vector<2x4x6x8xbf16> to vector<8x6x8xbf16>
    %36 = vector.shape_cast %13 : vector<12x32xbf16> to vector<2x6x32xbf16>
    %37 = vector.extract_strided_slice %36 {offsets = [0, 0, 0], sizes = [2, 6, 8], strides = [1, 1, 1]} : vector<2x6x32xbf16> to vector<2x6x8xbf16>
    %38 = vector.extract_strided_slice %36 {offsets = [0, 0, 8], sizes = [2, 6, 8], strides = [1, 1, 1]} : vector<2x6x32xbf16> to vector<2x6x8xbf16>
    %39 = vector.extract_strided_slice %36 {offsets = [0, 0, 16], sizes = [2, 6, 8], strides = [1, 1, 1]} : vector<2x6x32xbf16> to vector<2x6x8xbf16>
    %40 = vector.extract_strided_slice %36 {offsets = [0, 0, 24], sizes = [2, 6, 8], strides = [1, 1, 1]} : vector<2x6x32xbf16> to vector<2x6x8xbf16>
    %41 = vector.shape_cast %37 : vector<2x6x8xbf16> to vector<2x1x6x8xbf16>
    %42 = vector.shape_cast %38 : vector<2x6x8xbf16> to vector<2x1x6x8xbf16>
    %43 = vector.shape_cast %39 : vector<2x6x8xbf16> to vector<2x1x6x8xbf16>
    %44 = vector.shape_cast %40 : vector<2x6x8xbf16> to vector<2x1x6x8xbf16>
    %45 = tpu.concatenate %41, %42, %43, %44 in 1 : vector<2x1x6x8xbf16>, vector<2x1x6x8xbf16>, vector<2x1x6x8xbf16>, vector<2x1x6x8xbf16> -> vector<2x4x6x8xbf16>
    %46 = vector.shape_cast %45 : vector<2x4x6x8xbf16> to vector<8x6x8xbf16>
    "tpu.trace_start"() <{level = 10 : i32, message = "bqd,bkd->bqk"}> : () -> ()
    %cst_14 = arith.constant dense<0.000000e+00> : vector<8x4x6xf32>
    %47 = tpu.matmul %24, %35, %cst_14 {dimension_numbers = #tpu.dot_dimension_numbers<[2], [2], [1], [1], [0, 0, 0, 1, 1, 1], [0], [0]>} : vector<8x4x8xbf16>, vector<8x6x8xbf16>, vector<8x4x6xf32> -> vector<8x4x6xf32>
    "tpu.trace_stop"() : () -> ()
    %48 = tpu.iota {dimensions = array<i32: 2>} : vector<8x4x6xi32>
    %c0_15 = arith.constant 0 : index
    %c0_16 = arith.constant 0 : index
    %c0_17 = arith.constant 0 : index
    %49 = vector.load %arg1[%c0_15, %c0_16, %c0_17] : memref<8x1x1xi32, #tpu.memory_space<vmem>>, vector<8x1x1xi32>
    %50 = vector.broadcast %49 : vector<8x1x1xi32> to vector<8x4x6xi32>
    %51 = arith.cmpi slt, %48, %50 : vector<8x4x6xi32>
    %cst_18 = arith.constant -1.000000e+06 : f32
    %52 = vector.broadcast %cst_18 : f32 to vector<8x4x6xf32>
    %53 = arith.select %51, %47, %52 : vector<8x4x6xi1>, vector<8x4x6xf32>
    %cst_19 = arith.constant dense<0xFF800000> : vector<8x4xf32>
    %54 = vector.multi_reduction <maximumf>, %53, %cst_19 [2] : vector<8x4x6xf32> to vector<8x4xf32>
    %55 = vector.shape_cast %54 : vector<8x4xf32> to vector<8x4x1xf32>
    %56 = vector.broadcast %55 : vector<8x4x1xf32> to vector<8x4x6xf32>
    %57 = arith.subf %53, %56 : vector<8x4x6xf32>
    %58 = math.exp %57 : vector<8x4x6xf32>
    %cst_20 = arith.constant dense<0.000000e+00> : vector<8x4xf32>
    %59 = vector.multi_reduction <add>, %58, %cst_20 [2] : vector<8x4x6xf32> to vector<8x4xf32>
    %60 = vector.shape_cast %59 : vector<8x4xf32> to vector<8x4x1xf32>
    %61 = tpu.reciprocal %60 {approx = true} : vector<8x4x1xf32> -> vector<8x4x1xf32>
    %62 = vector.broadcast %61 : vector<8x4x1xf32> to vector<8x4x6xf32>
    %63 = arith.mulf %58, %62 : vector<8x4x6xf32>
    %64 = arith.truncf %63 : vector<8x4x6xf32> to vector<8x4x6xbf16>
    "tpu.trace_start"() <{level = 10 : i32, message = "bqk,bkd->bqd"}> : () -> ()
    %cst_21 = arith.constant dense<0.000000e+00> : vector<8x4x8xf32>
    %65 = tpu.matmul %64, %46, %cst_21 {dimension_numbers = #tpu.dot_dimension_numbers<[2], [1], [1], [2], [0, 0, 0, 1, 1, 2], [0], [0]>} : vector<8x4x6xbf16>, vector<8x6x8xbf16>, vector<8x4x8xf32> -> vector<8x4x8xf32>
    "tpu.trace_stop"() : () -> ()
    %66 = vector.shape_cast %65 : vector<8x4x8xf32> to vector<2x4x4x8xf32>
    %67 = vector.extract_strided_slice %66 {offsets = [0, 0, 0, 0], sizes = [2, 1, 4, 8], strides = [1, 1, 1, 1]} : vector<2x4x4x8xf32> to vector<2x1x4x8xf32>
    %68 = vector.shape_cast %67 : vector<2x1x4x8xf32> to vector<2x4x8xf32>
    %69 = vector.shape_cast %68 : vector<2x4x8xf32> to vector<8x8xf32>
    %70 = arith.truncf %69 : vector<8x8xf32> to vector<8x8xbf16>
    %c0_22 = arith.constant 0 : index
    %c0_23 = arith.constant 0 : index
    %71 = vector.load %arg10[%c0_22, %c0_23] : memref<8x32xbf16, #tpu.memory_space<vmem>>, vector<8x8xbf16>
    tpu.vector_store %arg10[%c0_22, %c0_23], %70 {strides = array<i32>} : memref<8x32xbf16, #tpu.memory_space<vmem>>, vector<8x8xbf16>,
    %72 = vector.extract_strided_slice %66 {offsets = [0, 1, 0, 0], sizes = [2, 1, 4, 8], strides = [1, 1, 1, 1]} : vector<2x4x4x8xf32> to vector<2x1x4x8xf32>
    %73 = vector.shape_cast %72 : vector<2x1x4x8xf32> to vector<2x4x8xf32>
    %74 = vector.shape_cast %73 : vector<2x4x8xf32> to vector<8x8xf32>
    %75 = arith.truncf %74 : vector<8x8xf32> to vector<8x8xbf16>
    %c0_24 = arith.constant 0 : index
    %c8 = arith.constant 8 : index
    %76 = vector.load %arg10[%c0_24, %c8] : memref<8x32xbf16, #tpu.memory_space<vmem>>, vector<8x8xbf16>
    tpu.vector_store %arg10[%c0_24, %c8], %75 {strides = array<i32>} : memref<8x32xbf16, #tpu.memory_space<vmem>>, vector<8x8xbf16>,
    %77 = vector.extract_strided_slice %66 {offsets = [0, 2, 0, 0], sizes = [2, 1, 4, 8], strides = [1, 1, 1, 1]} : vector<2x4x4x8xf32> to vector<2x1x4x8xf32>
    %78 = vector.shape_cast %77 : vector<2x1x4x8xf32> to vector<2x4x8xf32>
    %79 = vector.shape_cast %78 : vector<2x4x8xf32> to vector<8x8xf32>
    %80 = arith.truncf %79 : vector<8x8xf32> to vector<8x8xbf16>
    %c0_25 = arith.constant 0 : index
    %c16 = arith.constant 16 : index
    %81 = vector.load %arg10[%c0_25, %c16] : memref<8x32xbf16, #tpu.memory_space<vmem>>, vector<8x8xbf16>
    tpu.vector_store %arg10[%c0_25, %c16], %80 {strides = array<i32>} : memref<8x32xbf16, #tpu.memory_space<vmem>>, vector<8x8xbf16>,
    %82 = vector.extract_strided_slice %66 {offsets = [0, 3, 0, 0], sizes = [2, 1, 4, 8], strides = [1, 1, 1, 1]} : vector<2x4x4x8xf32> to vector<2x1x4x8xf32>
    %83 = vector.shape_cast %82 : vector<2x1x4x8xf32> to vector<2x4x8xf32>
    %84 = vector.shape_cast %83 : vector<2x4x8xf32> to vector<8x8xf32>
    %85 = arith.truncf %84 : vector<8x8xf32> to vector<8x8xbf16>
    %c0_26 = arith.constant 0 : index
    %c24 = arith.constant 24 : index
    %86 = vector.load %arg10[%c0_26, %c24] : memref<8x32xbf16, #tpu.memory_space<vmem>>, vector<8x8xbf16>
    tpu.vector_store %arg10[%c0_26, %c24], %85 {strides = array<i32>} : memref<8x32xbf16, #tpu.memory_space<vmem>>, vector<8x8xbf16>,
    %c0_27 = arith.constant 0 : index
    %c0_28 = arith.constant 0 : index
    %87 = vector.load %arg10[%c0_27, %c0_28] : memref<8x32xbf16, #tpu.memory_space<vmem>>, vector<8x32xbf16>
    %c0_29 = arith.constant 0 : index
    %c0_30 = arith.constant 0 : index
    %88 = vector.load %arg8[%c0_29, %c0_30] : memref<32x32xbf16, #tpu.memory_space<vmem>>, vector<32x32xbf16>
    %cst_31 = arith.constant dense<0.000000e+00> : vector<8x32xf32>
    %89 = tpu.matmul %87, %88, %cst_31 {dimension_numbers = #tpu.dot_dimension_numbers<[1], [0], [0], [1], [0, 0, 1, 1], [], []>} : vector<8x32xbf16>, vector<32x32xbf16>, vector<8x32xf32> -> vector<8x32xf32>
    %c0_32 = arith.constant 0 : index
    %c0_33 = arith.constant 0 : index
    %90 = vector.load %arg9[%c0_32, %c0_33] : memref<8x32xf32, #tpu.memory_space<vmem>>, vector<8x32xf32>
    tpu.vector_store %arg9[%c0_32, %c0_33], %89 {strides = array<i32>} : memref<8x32xf32, #tpu.memory_space<vmem>>, vector<8x32xf32>,
    return
  }
  func.func @transform_0(%arg0: i32) -> (i32, i32, i32) {
    %c0_i32 = arith.constant 0 : i32
    %c0_i32_0 = arith.constant 0 : i32
    %c0_i32_1 = arith.constant 0 : i32
    return %arg0, %c0_i32, %c0_i32_0 : i32, i32, i32
  }
  func.func @transform_1(%arg0: i32) -> (i32, i32) {
    %c0_i32 = arith.constant 0 : i32
    %c0_i32_0 = arith.constant 0 : i32
    return %arg0, %c0_i32 : i32, i32
  }
  func.func @transform_2(%arg0: i32) -> (i32, i32) {
    %c0_i32 = arith.constant 0 : i32
    %c0_i32_0 = arith.constant 0 : i32
    return %arg0, %c0_i32 : i32, i32
  }
  func.func @transform_3(%arg0: i32) -> (i32, i32) {
    %c0_i32 = arith.constant 0 : i32
    %c0_i32_0 = arith.constant 0 : i32
    return %arg0, %c0_i32 : i32, i32
  }
  func.func @transform_4(%arg0: i32) -> (i32, i32) {
    %c0_i32 = arith.constant 0 : i32
    %c0_i32_0 = arith.constant 0 : i32
    %c0_i32_1 = arith.constant 0 : i32
    return %c0_i32, %c0_i32_0 : i32, i32
  }
  func.func @transform_5(%arg0: i32) -> (i32, i32) {
    %c0_i32 = arith.constant 0 : i32
    %c0_i32_0 = arith.constant 0 : i32
    %c0_i32_1 = arith.constant 0 : i32
    return %c0_i32, %c0_i32_0 : i32, i32
  }
  func.func @transform_6(%arg0: i32) -> (i32, i32) {
    %c0_i32 = arith.constant 0 : i32
    %c0_i32_0 = arith.constant 0 : i32
    %c0_i32_1 = arith.constant 0 : i32
    return %c0_i32, %c0_i32_0 : i32, i32
  }
  func.func @transform_7(%arg0: i32) -> (i32, i32) {
    %c0_i32 = arith.constant 0 : i32
    %c0_i32_0 = arith.constant 0 : i32
    %c0_i32_1 = arith.constant 0 : i32
    return %c0_i32, %c0_i32_0 : i32, i32
  }
  func.func @transform_8(%arg0: i32) -> (i32, i32) {
    %c0_i32 = arith.constant 0 : i32
    %c0_i32_0 = arith.constant 0 : i32
    return %arg0, %c0_i32 : i32, i32
  }
}

</mosaic_0001>

<llo_original>
// kernel: tpu_custom_call.1
$region0: #{tpu_custom_call.1}
  #allocation0 [shape = 'u32[]', space=smem, size = 0x4, offset = 0x4, fixed_abs, tag = 'smem constant byte address 0x4 - core index']
  #allocation1 [shape = 'u32[144,128]{1,0:T(1,128)}', space=vmem, size = 0x12000, scoped, tag = 'internal scratch']
  #allocation2 [shape = 'bf16[8,32]{1,0:T(8,128)(2,1)}', space=vmem, size = 0x800, scoped, tag = 'scratch operand']
  %s0 = inlined_call_operand.vmem [shape: s32[8,1,1], index: 0, kind: input, shape index: {}]
  %s1 = inlined_call_operand.vmem [shape: bf16[8,5], index: 1, kind: input, shape index: {}]
  %s2 = inlined_call_operand.vmem [shape: bf16[12,4], index: 2, kind: input, shape index: {}]
  %s3 = inlined_call_operand.vmem [shape: bf16[12,3], index: 3, kind: input, shape index: {}]
  %s4 = inlined_call_operand.vmem [shape: bf16[5,32], index: 4, kind: input, shape index: {}]
  %s5 = inlined_call_operand.vmem [shape: bf16[4,32], index: 5, kind: input, shape index: {}]
  %s6 = inlined_call_operand.vmem [shape: bf16[3,32], index: 6, kind: input, shape index: {}]
  %s7 = inlined_call_operand.vmem [shape: bf16[32,32], index: 7, kind: input, shape index: {}]
  %s8 = inlined_call_operand.hbm [shape: f32[8,32], index: 8, kind: output, shape index: {}]
  %s9 = sld [smem:[#allocation0]]
  $region42: #{tpu_custom_call.1} parent=0
    _
  %s11 = ssub.s32 1, %s9
  %s12 = scalar_select 0, %s11, %s9
  $region1: #{tpu_custom_call.1} parent=0
    #allocation3 [shape = 'u8[4096]{0}', space=vmem, size = 0x1000, scoped, tag = 'output window, operand 0, single buffered']
    #allocation4 [shape = 's32[1]{0}', space=sflag, size = 0x4, scoped, tag = 'scoped memory for tpu_custom_call.1']
    %13 = vsyncpa [#allocation4], 0
    // Predicated region
    $region2: #{tpu_custom_call.1} parent=1 // pred_check
      _
    $region3: #{tpu_custom_call.1} parent=1 // pred_check_branch
      %15 = sbr.rel (0) target = $region5
    $region4: #{tpu_custom_call.1} parent=1 // pred_region
      _
    $region5: #{tpu_custom_call.1} parent=1 // pred_fallthru
      _
    // Predicated region
    $region6: #{tpu_custom_call.1} parent=1 // pred_check
      _
    $region7: #{tpu_custom_call.1} parent=1 // pred_check_branch
      %17 = sbr.rel (0) target = $region9
    $region8: #{tpu_custom_call.1} parent=1 // pred_region
      _
    $region9: #{tpu_custom_call.1} parent=1 // pred_fallthru
      _
    // Predicated region
    $region10: #{tpu_custom_call.1} parent=1 // pred_check
      _
    $region11: #{tpu_custom_call.1} parent=1 // pred_check_branch
      %19 = sbr.rel (0) target = $region13
    $region12: #{tpu_custom_call.1} parent=1 // pred_region
      _
    $region13: #{tpu_custom_call.1} parent=1 // pred_fallthru
      _
    // Predicated region
    $region14: #{tpu_custom_call.1} parent=1 // pred_check
      _
    $region15: #{tpu_custom_call.1} parent=1 // pred_check_branch
      %21 = sbr.rel (0) target = $region17
    $region16: #{tpu_custom_call.1} parent=1 // pred_region
      _
    $region17: #{tpu_custom_call.1} parent=1 // pred_fallthru
      _
    // Predicated region
    $region18: #{tpu_custom_call.1} parent=1 // pred_check
      _
    $region19: #{tpu_custom_call.1} parent=1 // pred_check_branch
      %23 = sbr.rel (0) target = $region21
    $region20: #{tpu_custom_call.1} parent=1 // pred_region
      _
    $region21: #{tpu_custom_call.1} parent=1 // pred_fallthru
      _
    // Predicated region
    $region22: #{tpu_custom_call.1} parent=1 // pred_check
      _
    $region23: #{tpu_custom_call.1} parent=1 // pred_check_branch
      %25 = sbr.rel (0) target = $region25
    $region24: #{tpu_custom_call.1} parent=1 // pred_region
      _
    $region25: #{tpu_custom_call.1} parent=1 // pred_fallthru
      _
    // Predicated region
    $region26: #{tpu_custom_call.1} parent=1 // pred_check
      _
    $region27: #{tpu_custom_call.1} parent=1 // pred_check_branch
      %27 = sbr.rel (0) target = $region29
    $region28: #{tpu_custom_call.1} parent=1 // pred_region
      _
    $region29: #{tpu_custom_call.1} parent=1 // pred_fallthru
      _
    // Predicated region
    $region30: #{tpu_custom_call.1} parent=1 // pred_check
      _
    $region31: #{tpu_custom_call.1} parent=1 // pred_check_branch
      %29 = sbr.rel (0) target = $region33
    $region32: #{tpu_custom_call.1} parent=1 // pred_region
      _
    $region33: #{tpu_custom_call.1} parent=1 // pred_fallthru
      _
    %v31 = vld [vmem:[%s1] sm:$0xf]
    %v32 = vld [vmem:[%s4] sm:$0x7]
    %vm33 = vcmask 39936
    %v35 = vsel %vm33, %v31, 0
    %vm37 = vcmask 1041408
    %vm38 = vcmask 1042432
    %v39 = vsel %vm37, 4294967295, 65535
    %v40 = vsel %vm38, %v39, 0
    %v42 = vand.u32 %v32, %v40
    %44 = vmatprep.subr.bf16.mxu0 0
    %45 = vmatpush1.bf16.msra.mxu0 0
    %46 = vmatprep.subr.bf16.mxu0 0
    %47 = vmatpush1.bf16.msra.mxu0 0
    %48 = vmatprep.subr.bf16.mxu0 0
    %49 = vmatpush1.bf16.msra.mxu0 0
    %50 = vmatprep.subr.bf16.mxu0 0
    %51 = vmatpush1.bf16.msra.mxu0 0
    %52 = vmatprep.subr.bf16.mxu0 0
    %53 = vmatpush1.bf16.msra.mxu0 0
    %54 = vmatprep.subr.bf16.mxu0 0
    %55 = vmatpush1.bf16.msra.mxu0 0
    %56 = vmatprep.subr.bf16.mxu0 0
    %57 = vmatpush1.bf16.msra.mxu0 0
    %58 = vmatprep.subr.bf16.mxu0 0
    %59 = vmatpush1.bf16.msra.mxu0 %v42
    %60 = vmatprep.subr.bf16.mxu0 0
    %61 = vmatpush2.bf16.msra.mxu0 0
    %62 = vmatprep.subr.bf16.mxu0 0
    %63 = vmatpush2.bf16.msra.mxu0 0
    %64 = vmatprep.subr.bf16.mxu0 0
    %65 = vmatpush2.bf16.msra.mxu0 0
    %66 = vmatprep.subr.bf16.mxu0 0
    %67 = vmatpush2.bf16.msra.mxu0 0
    %68 = vmatprep.subr.bf16.mxu0 0
    %69 = vmatpush2.bf16.msra.mxu0 0
    %70 = vmatprep.subr.bf16.mxu0 0
    %71 = vmatpush2.bf16.msra.mxu0 0
    %72 = vmatprep.subr.bf16.mxu0 0
    %73 = vmatpush2.bf16.msra.mxu0 0
    %74 = vmatprep.subr.bf16.mxu0 0
    %75 = vmatpush2.bf16.msra.mxu0 0
    %76 = vmatprep.mubr.bf16.mxu0 0
    %77 = vmatmul.mubr.bf16.gmra.mxu0 %v35
    %v78 = vpop.f32.mrf.mxu0
    %v79 = vadd.f32 0.0, %v78
    %v80 = vpop.f32.mrf.mxu0
    %v81 = vpop.f32.mrf.mxu0
    %v82 = vpop.f32.mrf.mxu0
    %83 = vdwg.mxu0
    %v84 = vld [vmem:[%s2] sm:$0xf]
    %v85 = vld [vmem:[%s2 + $0x4] sm:$0x3]
    %v86 = vld [vmem:[%s5] sm:$0x3]
    %v89 = vunpack.c.l.b16 %v84
    %v90 = vunpack.c.l.b16 %v85
    %v91 = vpack.c.b16 %v90, %v89
    %vm92 = vcmask 31744
    %v94 = vsel %vm92, %v91, 0
    %v97 = vsel %vm37, %v86, 0
    %99 = vmatprep.subr.bf16.mxu0 0
    %100 = vmatpush1.bf16.msra.mxu0 0
    %101 = vmatprep.subr.bf16.mxu0 0
    %102 = vmatpush1.bf16.msra.mxu0 0
    %103 = vmatprep.subr.bf16.mxu0 0
    %104 = vmatpush1.bf16.msra.mxu0 0
    %105 = vmatprep.subr.bf16.mxu0 0
    %106 = vmatpush1.bf16.msra.mxu0 0
    %107 = vmatprep.subr.bf16.mxu0 0
    %108 = vmatpush1.bf16.msra.mxu0 0
    %109 = vmatprep.subr.bf16.mxu0 0
    %110 = vmatpush1.bf16.msra.mxu0 0
    %111 = vmatprep.subr.bf16.mxu0 0
    %112 = vmatpush1.bf16.msra.mxu0 0
    %113 = vmatprep.subr.bf16.mxu0 0
    %114 = vmatpush1.bf16.msra.mxu0 %v97
    %115 = vmatprep.subr.bf16.mxu0 0
    %116 = vmatpush2.bf16.msra.mxu0 0
    %117 = vmatprep.subr.bf16.mxu0 0
    %118 = vmatpush2.bf16.msra.mxu0 0
    %119 = vmatprep.subr.bf16.mxu0 0
    %120 = vmatpush2.bf16.msra.mxu0 0
    %121 = vmatprep.subr.bf16.mxu0 0
    %122 = vmatpush2.bf16.msra.mxu0 0
    %123 = vmatprep.subr.bf16.mxu0 0
    %124 = vmatpush2.bf16.msra.mxu0 0
    %125 = vmatprep.subr.bf16.mxu0 0
    %126 = vmatpush2.bf16.msra.mxu0 0
    %127 = vmatprep.subr.bf16.mxu0 0
    %128 = vmatpush2.bf16.msra.mxu0 0
    %129 = vmatprep.subr.bf16.mxu0 0
    %130 = vmatpush2.bf16.msra.mxu0 0
    %131 = vmatprep.mubr.bf16.mxu0 0
    %132 = vmatmul.mubr.bf16.gmra.mxu0 %v94
    %v133 = vpop.f32.mrf.mxu0
    %v134 = vadd.f32 0.0, %v133
    %v135 = vpop.f32.mrf.mxu0
    %v136 = vpop.f32.mrf.mxu0
    %v137 = vadd.f32 0.0, %v136
    %v138 = vpop.f32.mrf.mxu0
    %139 = vdwg.mxu0
    %v140 = vld [vmem:[%s3] sm:$0xf]
    %v141 = vld [vmem:[%s3 + $0x4] sm:$0x3]
    %v142 = vld [vmem:[%s6] sm:$0x3]
    %v145 = vunpack.c.l.b16 %v140
    %v146 = vunpack.c.l.b16 %v141
    %v147 = vpack.c.b16 %v146, %v145
    %vm148 = vcmask 23552
    %v150 = vsel %vm148, %v147, 0
    %vm152 = vcmask 1040384
    %v153 = vsel %vm152, 4294967295, 65535
    %v154 = vsel %vm37, %v153, 0
    %v156 = vand.u32 %v142, %v154
    %158 = vmatprep.subr.bf16.mxu0 0
    %159 = vmatpush1.bf16.msra.mxu0 0
    %160 = vmatprep.subr.bf16.mxu0 0
    %161 = vmatpush1.bf16.msra.mxu0 0
    %162 = vmatprep.subr.bf16.mxu0 0
    %163 = vmatpush1.bf16.msra.mxu0 0
    %164 = vmatprep.subr.bf16.mxu0 0
    %165 = vmatpush1.bf16.msra.mxu0 0
    %166 = vmatprep.subr.bf16.mxu0 0
    %167 = vmatpush1.bf16.msra.mxu0 0
    %168 = vmatprep.subr.bf16.mxu0 0
    %169 = vmatpush1.bf16.msra.mxu0 0
    %170 = vmatprep.subr.bf16.mxu0 0
    %171 = vmatpush1.bf16.msra.mxu0 0
    %172 = vmatprep.subr.bf16.mxu0 0
    %173 = vmatpush1.bf16.msra.mxu0 %v156
    %174 = vmatprep.subr.bf16.mxu0 0
    %175 = vmatpush2.bf16.msra.mxu0 0
    %176 = vmatprep.subr.bf16.mxu0 0
    %177 = vmatpush2.bf16.msra.mxu0 0
    %178 = vmatprep.subr.bf16.mxu0 0
    %179 = vmatpush2.bf16.msra.mxu0 0
    %180 = vmatprep.subr.bf16.mxu0 0
    %181 = vmatpush2.bf16.msra.mxu0 0
    %182 = vmatprep.subr.bf16.mxu0 0
    %183 = vmatpush2.bf16.msra.mxu0 0
    %184 = vmatprep.subr.bf16.mxu0 0
    %185 = vmatpush2.bf16.msra.mxu0 0
    %186 = vmatprep.subr.bf16.mxu0 0
    %187 = vmatpush2.bf16.msra.mxu0 0
    %188 = vmatprep.subr.bf16.mxu0 0
    %189 = vmatpush2.bf16.msra.mxu0 0
    %190 = vmatprep.mubr.bf16.mxu0 0
    %191 = vmatmul.mubr.bf16.gmra.mxu0 %v150
    %v192 = vpop.f32.mrf.mxu0
    %v193 = vadd.f32 0.0, %v192
    %v194 = vpop.f32.mrf.mxu0
    %v195 = vpop.f32.mrf.mxu0
    %v196 = vadd.f32 0.0, %v195
    %v197 = vpop.f32.mrf.mxu0
    %198 = vdwg.mxu0
    %v199 = vmul.f32 %v79, 0.35355338
    %v200 = vpack.c.bf16 %v199, %v199
    %v201 = vpack.c.bf16 %v137, %v134
    %v202 = vpack.c.bf16 %v196, %v193
    %v205 = vunpack.c.l.s4 1983009808
    %v206 = vunpack.c.0.s8 %v205
    %v207 = vlaneseq
    %v208 = vshrl.u32 %v207, 7
    %v209 = vsub.s32 %v206, %v208
    %v210 = vrot.slane %v200, %v209
    %v211 = vcombine.high %v210, %v210
    %212 = vrot.lane.b32.xlu0 %v210, 120
    %v213 = vpop.permute.xlu0 %212
    %214 = vrot.lane.b32.xlu0 %v211, 120
    %v215 = vpop.permute.xlu0 %214
    %216 = vrot.lane.b32.xlu0 %v210, 112
    %v217 = vpop.permute.xlu0 %216
    %218 = vrot.lane.b32.xlu0 %v211, 112
    %v219 = vpop.permute.xlu0 %218
    %220 = vrot.lane.b32.xlu0 %v210, 104
    %v221 = vpop.permute.xlu0 %220
    %222 = vrot.lane.b32.xlu0 %v211, 104
    %v223 = vpop.permute.xlu0 %222
    %v225 = vcombine.high %v201, %v201
    %v227 = vunpack.c.l.s4 1966171168
    %v228 = vunpack.c.0.s8 %v227
    %v229 = vlaneseq
    %v230 = vshrl.u32 %v229, 7
    %v231 = vsub.s32 %v228, %v230
    %v232 = vrot.slane %v201, %v231
    %v234 = vunpack.c.l.s4 1966171168
    %v235 = vunpack.c.0.s8 %v234
    %v236 = vlaneseq
    %v237 = vshrl.u32 %v236, 7
    %v238 = vsub.s32 %v235, %v237
    %v239 = vrot.slane %v225, %v238
    %v240 = vcombine.high %v232, %v232
    %v241 = vcombine.high %v239, %v239
    %v243 = vunpack.c.l.s4 1966171168
    %v244 = vunpack.c.0.s8 %v243
    %v245 = vlaneseq
    %v246 = vshrl.u32 %v245, 7
    %v247 = vsub.s32 %v244, %v246
    %v248 = vrot.slane %v232, %v247
    %v250 = vunpack.c.l.s4 1966171168
    %v251 = vunpack.c.0.s8 %v250
    %v252 = vlaneseq
    %v253 = vshrl.u32 %v252, 7
    %v254 = vsub.s32 %v251, %v253
    %v255 = vrot.slane %v239, %v254
    %v257 = vunpack.c.l.s4 1966171168
    %v258 = vunpack.c.0.s8 %v257
    %v259 = vlaneseq
    %v260 = vshrl.u32 %v259, 7
    %v261 = vsub.s32 %v258, %v260
    %v262 = vrot.slane %v240, %v261
    %v264 = vunpack.c.l.s4 1966171168
    %v265 = vunpack.c.0.s8 %v264
    %v266 = vlaneseq
    %v267 = vshrl.u32 %v266, 7
    %v268 = vsub.s32 %v265, %v267
    %v269 = vrot.slane %v241, %v268
    %v270 = vcombine.high %v248, %v248
    %v271 = vcombine.high %v262, %v262
    %272 = vrot.lane.b32.xlu0 %v248, 120
    %v273 = vpop.permute.xlu0 %272
    %274 = vrot.lane.b32.xlu0 %v262, 120
    %v275 = vpop.permute.xlu0 %274
    %276 = vrot.lane.b32.xlu0 %v270, 120
    %v277 = vpop.permute.xlu0 %276
    %278 = vrot.lane.b32.xlu0 %v271, 120
    %v279 = vpop.permute.xlu0 %278
    %280 = vrot.lane.b32.xlu0 %v255, 120
    %v281 = vpop.permute.xlu0 %280
    %282 = vrot.lane.b32.xlu0 %v269, 120
    %v283 = vpop.permute.xlu0 %282
    %284 = vrot.lane.b32.xlu0 %v248, 112
    %v285 = vpop.permute.xlu0 %284
    %286 = vrot.lane.b32.xlu0 %v262, 112
    %v287 = vpop.permute.xlu0 %286
    %288 = vrot.lane.b32.xlu0 %v270, 112
    %v289 = vpop.permute.xlu0 %288
    %290 = vrot.lane.b32.xlu0 %v271, 112
    %v291 = vpop.permute.xlu0 %290
    %292 = vrot.lane.b32.xlu0 %v255, 112
    %v293 = vpop.permute.xlu0 %292
    %294 = vrot.lane.b32.xlu0 %v269, 112
    %v295 = vpop.permute.xlu0 %294
    %296 = vrot.lane.b32.xlu0 %v248, 104
    %v297 = vpop.permute.xlu0 %296
    %298 = vrot.lane.b32.xlu0 %v262, 104
    %v299 = vpop.permute.xlu0 %298
    %300 = vrot.lane.b32.xlu0 %v270, 104
    %v301 = vpop.permute.xlu0 %300
    %302 = vrot.lane.b32.xlu0 %v271, 104
    %v303 = vpop.permute.xlu0 %302
    %304 = vrot.lane.b32.xlu0 %v255, 104
    %v305 = vpop.permute.xlu0 %304
    %306 = vrot.lane.b32.xlu0 %v269, 104
    %v307 = vpop.permute.xlu0 %306
    %v309 = vcombine.high %v202, %v202
    %v311 = vunpack.c.l.s4 1966171168
    %v312 = vunpack.c.0.s8 %v311
    %v313 = vlaneseq
    %v314 = vshrl.u32 %v313, 7
    %v315 = vsub.s32 %v312, %v314
    %v316 = vrot.slane %v202, %v315
    %v318 = vunpack.c.l.s4 1966171168
    %v319 = vunpack.c.0.s8 %v318
    %v320 = vlaneseq
    %v321 = vshrl.u32 %v320, 7
    %v322 = vsub.s32 %v319, %v321
    %v323 = vrot.slane %v309, %v322
    %v324 = vcombine.high %v316, %v316
    %v325 = vcombine.high %v323, %v323
    %v327 = vunpack.c.l.s4 1966171168
    %v328 = vunpack.c.0.s8 %v327
    %v329 = vlaneseq
    %v330 = vshrl.u32 %v329, 7
    %v331 = vsub.s32 %v328, %v330
    %v332 = vrot.slane %v316, %v331
    %v334 = vunpack.c.l.s4 1966171168
    %v335 = vunpack.c.0.s8 %v334
    %v336 = vlaneseq
    %v337 = vshrl.u32 %v336, 7
    %v338 = vsub.s32 %v335, %v337
    %v339 = vrot.slane %v323, %v338
    %v341 = vunpack.c.l.s4 1966171168
    %v342 = vunpack.c.0.s8 %v341
    %v343 = vlaneseq
    %v344 = vshrl.u32 %v343, 7
    %v345 = vsub.s32 %v342, %v344
    %v346 = vrot.slane %v324, %v345
    %v348 = vunpack.c.l.s4 1966171168
    %v349 = vunpack.c.0.s8 %v348
    %v350 = vlaneseq
    %v351 = vshrl.u32 %v350, 7
    %v352 = vsub.s32 %v349, %v351
    %v353 = vrot.slane %v325, %v352
    %v354 = vcombine.high %v332, %v332
    %v355 = vcombine.high %v346, %v346
    %356 = vrot.lane.b32.xlu0 %v332, 120
    %v357 = vpop.permute.xlu0 %356
    %358 = vrot.lane.b32.xlu0 %v346, 120
    %v359 = vpop.permute.xlu0 %358
    %360 = vrot.lane.b32.xlu0 %v354, 120
    %v361 = vpop.permute.xlu0 %360
    %362 = vrot.lane.b32.xlu0 %v355, 120
    %v363 = vpop.permute.xlu0 %362
    %364 = vrot.lane.b32.xlu0 %v339, 120
    %v365 = vpop.permute.xlu0 %364
    %366 = vrot.lane.b32.xlu0 %v353, 120
    %v367 = vpop.permute.xlu0 %366
    %368 = vrot.lane.b32.xlu0 %v332, 112
    %v369 = vpop.permute.xlu0 %368
    %370 = vrot.lane.b32.xlu0 %v346, 112
    %v371 = vpop.permute.xlu0 %370
    %372 = vrot.lane.b32.xlu0 %v354, 112
    %v373 = vpop.permute.xlu0 %372
    %374 = vrot.lane.b32.xlu0 %v355, 112
    %v375 = vpop.permute.xlu0 %374
    %376 = vrot.lane.b32.xlu0 %v339, 112
    %v377 = vpop.permute.xlu0 %376
    %378 = vrot.lane.b32.xlu0 %v353, 112
    %v379 = vpop.permute.xlu0 %378
    %380 = vrot.lane.b32.xlu0 %v332, 104
    %v381 = vpop.permute.xlu0 %380
    %382 = vrot.lane.b32.xlu0 %v346, 104
    %v383 = vpop.permute.xlu0 %382
    %384 = vrot.lane.b32.xlu0 %v354, 104
    %v385 = vpop.permute.xlu0 %384
    %386 = vrot.lane.b32.xlu0 %v355, 104
    %v387 = vpop.permute.xlu0 %386
    %388 = vrot.lane.b32.xlu0 %v339, 104
    %v389 = vpop.permute.xlu0 %388
    %390 = vrot.lane.b32.xlu0 %v353, 104
    %v391 = vpop.permute.xlu0 %390
    %v392 = vcombine.low %v248, %v262
    %v394 = vunpack.c.l.s4 1966171168
    %v395 = vunpack.c.0.s8 %v394
    %v396 = vlaneseq
    %v397 = vshrl.u32 %v396, 7
    %v398 = vsub.s32 %v395, %v397
    %v399 = vrot.slane %v392, %v398
    %v401 = vunpack.c.l.s4 1966171168
    %v402 = vunpack.c.0.s8 %v401
    %v403 = vlaneseq
    %v404 = vshrl.u32 %v403, 7
    %v405 = vsub.s32 %v402, %v404
    %v406 = vrot.slane %v270, %v405
    %v407 = vcombine.low %v399, %v406
    %v409 = vunpack.c.l.s4 1966171168
    %v410 = vunpack.c.0.s8 %v409
    %v411 = vlaneseq
    %v412 = vshrl.u32 %v411, 7
    %v413 = vsub.s32 %v410, %v412
    %v414 = vrot.slane %v407, %v413
    %vm415 = vcmask 64512
    %v417 = vsel %vm415, %v210, 0
    %v420 = vsel %vm415, %v414, 0
    %422 = vmatprep.subr.bf16.mxu0 0
    %423 = vmatpush1.bf16.xpose.msra.mxu0 0
    %424 = vmatprep.subr.bf16.mxu0 0
    %425 = vmatpush1.bf16.xpose.msra.mxu0 0
    %426 = vmatprep.subr.bf16.mxu0 0
    %427 = vmatpush1.bf16.xpose.msra.mxu0 0
    %428 = vmatprep.subr.bf16.mxu0 0
    %429 = vmatpush1.bf16.xpose.msra.mxu0 0
    %430 = vmatprep.subr.bf16.mxu0 0
    %431 = vmatpush1.bf16.xpose.msra.mxu0 0
    %432 = vmatprep.subr.bf16.mxu0 0
    %433 = vmatpush1.bf16.xpose.msra.mxu0 0
    %434 = vmatprep.subr.bf16.mxu0 0
    %435 = vmatpush1.bf16.xpose.msra.mxu0 0
    %436 = vmatprep.subr.bf16.mxu0 0
    %437 = vmatpush1.bf16.xpose.msra.mxu0 %v420
    %438 = vmatprep.subr.bf16.mxu0 0
    %439 = vmatpush2.bf16.xpose.msra.mxu0 0
    %440 = vmatprep.subr.bf16.mxu0 0
    %441 = vmatpush2.bf16.xpose.msra.mxu0 0
    %442 = vmatprep.subr.bf16.mxu0 0
    %443 = vmatpush2.bf16.xpose.msra.mxu0 0
    %444 = vmatprep.subr.bf16.mxu0 0
    %445 = vmatpush2.bf16.xpose.msra.mxu0 0
    %446 = vmatprep.subr.bf16.mxu0 0
    %447 = vmatpush2.bf16.xpose.msra.mxu0 0
    %448 = vmatprep.subr.bf16.mxu0 0
    %449 = vmatpush2.bf16.xpose.msra.mxu0 0
    %450 = vmatprep.subr.bf16.mxu0 0
    %451 = vmatpush2.bf16.xpose.msra.mxu0 0
    %452 = vmatprep.subr.bf16.mxu0 0
    %453 = vmatpush2.bf16.xpose.msra.mxu0 0
    %454 = vmatprep.mubr.bf16.mxu0 0
    %455 = vmatmul.mubr.bf16.gmra.mxu0 %v417
    %v456 = vpop.f32.mrf.mxu0
    %v457 = vadd.f32 0.0, %v456
    %v458 = vpop.f32.mrf.mxu0
    %v459 = vpop.f32.mrf.mxu0
    %v460 = vpop.f32.mrf.mxu0
    %461 = vdwg.mxu0
    %v462 = vcombine.low %v273, %v275
    %v464 = vunpack.c.l.s4 1966171168
    %v465 = vunpack.c.0.s8 %v464
    %v466 = vlaneseq
    %v467 = vshrl.u32 %v466, 7
    %v468 = vsub.s32 %v465, %v467
    %v469 = vrot.slane %v462, %v468
    %v471 = vunpack.c.l.s4 1966171168
    %v472 = vunpack.c.0.s8 %v471
    %v473 = vlaneseq
    %v474 = vshrl.u32 %v473, 7
    %v475 = vsub.s32 %v472, %v474
    %v476 = vrot.slane %v277, %v475
    %v477 = vcombine.low %v469, %v476
    %v479 = vunpack.c.l.s4 1966171168
    %v480 = vunpack.c.0.s8 %v479
    %v481 = vlaneseq
    %v482 = vshrl.u32 %v481, 7
    %v483 = vsub.s32 %v480, %v482
    %v484 = vrot.slane %v477, %v483
    %v486 = vsel %vm415, %v213, 0
    %v489 = vsel %vm415, %v484, 0
    %491 = vmatprep.subr.bf16.mxu0 0
    %492 = vmatpush1.bf16.xpose.msra.mxu0 0
    %493 = vmatprep.subr.bf16.mxu0 0
    %494 = vmatpush1.bf16.xpose.msra.mxu0 0
    %495 = vmatprep.subr.bf16.mxu0 0
    %496 = vmatpush1.bf16.xpose.msra.mxu0 0
    %497 = vmatprep.subr.bf16.mxu0 0
    %498 = vmatpush1.bf16.xpose.msra.mxu0 0
    %499 = vmatprep.subr.bf16.mxu0 0
    %500 = vmatpush1.bf16.xpose.msra.mxu0 0
    %501 = vmatprep.subr.bf16.mxu0 0
    %502 = vmatpush1.bf16.xpose.msra.mxu0 0
    %503 = vmatprep.subr.bf16.mxu0 0
    %504 = vmatpush1.bf16.xpose.msra.mxu0 0
    %505 = vmatprep.subr.bf16.mxu0 0
    %506 = vmatpush1.bf16.xpose.msra.mxu0 %v489
    %507 = vmatprep.subr.bf16.mxu0 0
    %508 = vmatpush2.bf16.xpose.msra.mxu0 0
    %509 = vmatprep.subr.bf16.mxu0 0
    %510 = vmatpush2.bf16.xpose.msra.mxu0 0
    %511 = vmatprep.subr.bf16.mxu0 0
    %512 = vmatpush2.bf16.xpose.msra.mxu0 0
    %513 = vmatprep.subr.bf16.mxu0 0
    %514 = vmatpush2.bf16.xpose.msra.mxu0 0
    %515 = vmatprep.subr.bf16.mxu0 0
    %516 = vmatpush2.bf16.xpose.msra.mxu0 0
    %517 = vmatprep.subr.bf16.mxu0 0
    %518 = vmatpush2.bf16.xpose.msra.mxu0 0
    %519 = vmatprep.subr.bf16.mxu0 0
    %520 = vmatpush2.bf16.xpose.msra.mxu0 0
    %521 = vmatprep.subr.bf16.mxu0 0
    %522 = vmatpush2.bf16.xpose.msra.mxu0 0
    %523 = vmatprep.mubr.bf16.mxu0 0
    %524 = vmatmul.mubr.bf16.gmra.mxu0 %v486
    %v525 = vpop.f32.mrf.mxu0
    %v526 = vadd.f32 0.0, %v525
    %v527 = vpop.f32.mrf.mxu0
    %v528 = vpop.f32.mrf.mxu0
    %v529 = vpop.f32.mrf.mxu0
    %530 = vdwg.mxu0
    %v531 = vcombine.low %v285, %v287
    %v533 = vunpack.c.l.s4 1966171168
    %v534 = vunpack.c.0.s8 %v533
    %v535 = vlaneseq
    %v536 = vshrl.u32 %v535, 7
    %v537 = vsub.s32 %v534, %v536
    %v538 = vrot.slane %v531, %v537
    %v540 = vunpack.c.l.s4 1966171168
    %v541 = vunpack.c.0.s8 %v540
    %v542 = vlaneseq
    %v543 = vshrl.u32 %v542, 7
    %v544 = vsub.s32 %v541, %v543
    %v545 = vrot.slane %v289, %v544
    %v546 = vcombine.low %v538, %v545
    %v548 = vunpack.c.l.s4 1966171168
    %v549 = vunpack.c.0.s8 %v548
    %v550 = vlaneseq
    %v551 = vshrl.u32 %v550, 7
    %v552 = vsub.s32 %v549, %v551
    %v553 = vrot.slane %v546, %v552
    %v555 = vsel %vm415, %v217, 0
    %v558 = vsel %vm415, %v553, 0
    %560 = vmatprep.subr.bf16.mxu0 0
    %561 = vmatpush1.bf16.xpose.msra.mxu0 0
    %562 = vmatprep.subr.bf16.mxu0 0
    %563 = vmatpush1.bf16.xpose.msra.mxu0 0
    %564 = vmatprep.subr.bf16.mxu0 0
    %565 = vmatpush1.bf16.xpose.msra.mxu0 0
    %566 = vmatprep.subr.bf16.mxu0 0
    %567 = vmatpush1.bf16.xpose.msra.mxu0 0
    %568 = vmatprep.subr.bf16.mxu0 0
    %569 = vmatpush1.bf16.xpose.msra.mxu0 0
    %570 = vmatprep.subr.bf16.mxu0 0
    %571 = vmatpush1.bf16.xpose.msra.mxu0 0
    %572 = vmatprep.subr.bf16.mxu0 0
    %573 = vmatpush1.bf16.xpose.msra.mxu0 0
    %574 = vmatprep.subr.bf16.mxu0 0
    %575 = vmatpush1.bf16.xpose.msra.mxu0 %v558
    %576 = vmatprep.subr.bf16.mxu0 0
    %577 = vmatpush2.bf16.xpose.msra.mxu0 0
    %578 = vmatprep.subr.bf16.mxu0 0
    %579 = vmatpush2.bf16.xpose.msra.mxu0 0
    %580 = vmatprep.subr.bf16.mxu0 0
    %581 = vmatpush2.bf16.xpose.msra.mxu0 0
    %582 = vmatprep.subr.bf16.mxu0 0
    %583 = vmatpush2.bf16.xpose.msra.mxu0 0
    %584 = vmatprep.subr.bf16.mxu0 0
    %585 = vmatpush2.bf16.xpose.msra.mxu0 0
    %586 = vmatprep.subr.bf16.mxu0 0
    %587 = vmatpush2.bf16.xpose.msra.mxu0 0
    %588 = vmatprep.subr.bf16.mxu0 0
    %589 = vmatpush2.bf16.xpose.msra.mxu0 0
    %590 = vmatprep.subr.bf16.mxu0 0
    %591 = vmatpush2.bf16.xpose.msra.mxu0 0
    %592 = vmatprep.mubr.bf16.mxu0 0
    %593 = vmatmul.mubr.bf16.gmra.mxu0 %v555
    %v594 = vpop.f32.mrf.mxu0
    %v595 = vadd.f32 0.0, %v594
    %v596 = vpop.f32.mrf.mxu0
    %v597 = vpop.f32.mrf.mxu0
    %v598 = vpop.f32.mrf.mxu0
    %599 = vdwg.mxu0
    %v600 = vcombine.low %v297, %v299
    %v602 = vunpack.c.l.s4 1966171168
    %v603 = vunpack.c.0.s8 %v602
    %v604 = vlaneseq
    %v605 = vshrl.u32 %v604, 7
    %v606 = vsub.s32 %v603, %v605
    %v607 = vrot.slane %v600, %v606
    %v609 = vunpack.c.l.s4 1966171168
    %v610 = vunpack.c.0.s8 %v609
    %v611 = vlaneseq
    %v612 = vshrl.u32 %v611, 7
    %v613 = vsub.s32 %v610, %v612
    %v614 = vrot.slane %v301, %v613
    %v615 = vcombine.low %v607, %v614
    %v617 = vunpack.c.l.s4 1966171168
    %v618 = vunpack.c.0.s8 %v617
    %v619 = vlaneseq
    %v620 = vshrl.u32 %v619, 7
    %v621 = vsub.s32 %v618, %v620
    %v622 = vrot.slane %v615, %v621
    %v624 = vsel %vm415, %v221, 0
    %v627 = vsel %vm415, %v622, 0
    %629 = vmatprep.subr.bf16.mxu0 0
    %630 = vmatpush1.bf16.xpose.msra.mxu0 0
    %631 = vmatprep.subr.bf16.mxu0 0
    %632 = vmatpush1.bf16.xpose.msra.mxu0 0
    %633 = vmatprep.subr.bf16.mxu0 0
    %634 = vmatpush1.bf16.xpose.msra.mxu0 0
    %635 = vmatprep.subr.bf16.mxu0 0
    %636 = vmatpush1.bf16.xpose.msra.mxu0 0
    %637 = vmatprep.subr.bf16.mxu0 0
    %638 = vmatpush1.bf16.xpose.msra.mxu0 0
    %639 = vmatprep.subr.bf16.mxu0 0
    %640 = vmatpush1.bf16.xpose.msra.mxu0 0
    %641 = vmatprep.subr.bf16.mxu0 0
    %642 = vmatpush1.bf16.xpose.msra.mxu0 0
    %643 = vmatprep.subr.bf16.mxu0 0
    %644 = vmatpush1.bf16.xpose.msra.mxu0 %v627
    %645 = vmatprep.subr.bf16.mxu0 0
    %646 = vmatpush2.bf16.xpose.msra.mxu0 0
    %647 = vmatprep.subr.bf16.mxu0 0
    %648 = vmatpush2.bf16.xpose.msra.mxu0 0
    %649 = vmatprep.subr.bf16.mxu0 0
    %650 = vmatpush2.bf16.xpose.msra.mxu0 0
    %651 = vmatprep.subr.bf16.mxu0 0
    %652 = vmatpush2.bf16.xpose.msra.mxu0 0
    %653 = vmatprep.subr.bf16.mxu0 0
    %654 = vmatpush2.bf16.xpose.msra.mxu0 0
    %655 = vmatprep.subr.bf16.mxu0 0
    %656 = vmatpush2.bf16.xpose.msra.mxu0 0
    %657 = vmatprep.subr.bf16.mxu0 0
    %658 = vmatpush2.bf16.xpose.msra.mxu0 0
    %659 = vmatprep.subr.bf16.mxu0 0
    %660 = vmatpush2.bf16.xpose.msra.mxu0 0
    %661 = vmatprep.mubr.bf16.mxu0 0
    %662 = vmatmul.mubr.bf16.gmra.mxu0 %v624
    %v663 = vpop.f32.mrf.mxu0
    %v664 = vadd.f32 0.0, %v663
    %v665 = vpop.f32.mrf.mxu0
    %v666 = vpop.f32.mrf.mxu0
    %v667 = vpop.f32.mrf.mxu0
    %668 = vdwg.mxu0
    %v669 = vcombine.low %v271, %v255
    %v671 = vunpack.c.l.s4 1966171168
    %v672 = vunpack.c.0.s8 %v671
    %v673 = vlaneseq
    %v674 = vshrl.u32 %v673, 7
    %v675 = vsub.s32 %v672, %v674
    %v676 = vrot.slane %v669, %v675
    %v678 = vunpack.c.l.s4 1966171168
    %v679 = vunpack.c.0.s8 %v678
    %v680 = vlaneseq
    %v681 = vshrl.u32 %v680, 7
    %v682 = vsub.s32 %v679, %v681
    %v683 = vrot.slane %v269, %v682
    %v684 = vcombine.low %v676, %v683
    %v686 = vunpack.c.l.s4 1966171168
    %v687 = vunpack.c.0.s8 %v686
    %v688 = vlaneseq
    %v689 = vshrl.u32 %v688, 7
    %v690 = vsub.s32 %v687, %v689
    %v691 = vrot.slane %v684, %v690
    %v693 = vsel %vm415, %v211, 0
    %v696 = vsel %vm415, %v691, 0
    %698 = vmatprep.subr.bf16.mxu0 0
    %699 = vmatpush1.bf16.xpose.msra.mxu0 0
    %700 = vmatprep.subr.bf16.mxu0 0
    %701 = vmatpush1.bf16.xpose.msra.mxu0 0
    %702 = vmatprep.subr.bf16.mxu0 0
    %703 = vmatpush1.bf16.xpose.msra.mxu0 0
    %704 = vmatprep.subr.bf16.mxu0 0
    %705 = vmatpush1.bf16.xpose.msra.mxu0 0
    %706 = vmatprep.subr.bf16.mxu0 0
    %707 = vmatpush1.bf16.xpose.msra.mxu0 0
    %708 = vmatprep.subr.bf16.mxu0 0
    %709 = vmatpush1.bf16.xpose.msra.mxu0 0
    %710 = vmatprep.subr.bf16.mxu0 0
    %711 = vmatpush1.bf16.xpose.msra.mxu0 0
    %712 = vmatprep.subr.bf16.mxu0 0
    %713 = vmatpush1.bf16.xpose.msra.mxu0 %v696
    %714 = vmatprep.subr.bf16.mxu0 0
    %715 = vmatpush2.bf16.xpose.msra.mxu0 0
    %716 = vmatprep.subr.bf16.mxu0 0
    %717 = vmatpush2.bf16.xpose.msra.mxu0 0
    %718 = vmatprep.subr.bf16.mxu0 0
    %719 = vmatpush2.bf16.xpose.msra.mxu0 0
    %720 = vmatprep.subr.bf16.mxu0 0
    %721 = vmatpush2.bf16.xpose.msra.mxu0 0
    %722 = vmatprep.subr.bf16.mxu0 0
    %723 = vmatpush2.bf16.xpose.msra.mxu0 0
    %724 = vmatprep.subr.bf16.mxu0 0
    %725 = vmatpush2.bf16.xpose.msra.mxu0 0
    %726 = vmatprep.subr.bf16.mxu0 0
    %727 = vmatpush2.bf16.xpose.msra.mxu0 0
    %728 = vmatprep.subr.bf16.mxu0 0
    %729 = vmatpush2.bf16.xpose.msra.mxu0 0
    %730 = vmatprep.mubr.bf16.mxu0 0
    %731 = vmatmul.mubr.bf16.gmra.mxu0 %v693
    %v732 = vpop.f32.mrf.mxu0
    %v733 = vadd.f32 0.0, %v732
    %v734 = vpop.f32.mrf.mxu0
    %v735 = vpop.f32.mrf.mxu0
    %v736 = vpop.f32.mrf.mxu0
    %737 = vdwg.mxu0
    %v738 = vcombine.low %v279, %v281
    %v740 = vunpack.c.l.s4 1966171168
    %v741 = vunpack.c.0.s8 %v740
    %v742 = vlaneseq
    %v743 = vshrl.u32 %v742, 7
    %v744 = vsub.s32 %v741, %v743
    %v745 = vrot.slane %v738, %v744
    %v747 = vunpack.c.l.s4 1966171168
    %v748 = vunpack.c.0.s8 %v747
    %v749 = vlaneseq
    %v750 = vshrl.u32 %v749, 7
    %v751 = vsub.s32 %v748, %v750
    %v752 = vrot.slane %v283, %v751
    %v753 = vcombine.low %v745, %v752
    %v755 = vunpack.c.l.s4 1966171168
    %v756 = vunpack.c.0.s8 %v755
    %v757 = vlaneseq
    %v758 = vshrl.u32 %v757, 7
    %v759 = vsub.s32 %v756, %v758
    %v760 = vrot.slane %v753, %v759
    %v762 = vsel %vm415, %v215, 0
    %v765 = vsel %vm415, %v760, 0
    %767 = vmatprep.subr.bf16.mxu0 0
    %768 = vmatpush1.bf16.xpose.msra.mxu0 0
    %769 = vmatprep.subr.bf16.mxu0 0
    %770 = vmatpush1.bf16.xpose.msra.mxu0 0
    %771 = vmatprep.subr.bf16.mxu0 0
    %772 = vmatpush1.bf16.xpose.msra.mxu0 0
    %773 = vmatprep.subr.bf16.mxu0 0
    %774 = vmatpush1.bf16.xpose.msra.mxu0 0
    %775 = vmatprep.subr.bf16.mxu0 0
    %776 = vmatpush1.bf16.xpose.msra.mxu0 0
    %777 = vmatprep.subr.bf16.mxu0 0
    %778 = vmatpush1.bf16.xpose.msra.mxu0 0
    %779 = vmatprep.subr.bf16.mxu0 0
    %780 = vmatpush1.bf16.xpose.msra.mxu0 0
    %781 = vmatprep.subr.bf16.mxu0 0
    %782 = vmatpush1.bf16.xpose.msra.mxu0 %v765
    %783 = vmatprep.subr.bf16.mxu0 0
    %784 = vmatpush2.bf16.xpose.msra.mxu0 0
    %785 = vmatprep.subr.bf16.mxu0 0
    %786 = vmatpush2.bf16.xpose.msra.mxu0 0
    %787 = vmatprep.subr.bf16.mxu0 0
    %788 = vmatpush2.bf16.xpose.msra.mxu0 0
    %789 = vmatprep.subr.bf16.mxu0 0
    %790 = vmatpush2.bf16.xpose.msra.mxu0 0
    %791 = vmatprep.subr.bf16.mxu0 0
    %792 = vmatpush2.bf16.xpose.msra.mxu0 0
    %793 = vmatprep.subr.bf16.mxu0 0
    %794 = vmatpush2.bf16.xpose.msra.mxu0 0
    %795 = vmatprep.subr.bf16.mxu0 0
    %796 = vmatpush2.bf16.xpose.msra.mxu0 0
    %797 = vmatprep.subr.bf16.mxu0 0
    %798 = vmatpush2.bf16.xpose.msra.mxu0 0
    %799 = vmatprep.mubr.bf16.mxu0 0
    %800 = vmatmul.mubr.bf16.gmra.mxu0 %v762
    %v801 = vpop.f32.mrf.mxu0
    %v802 = vadd.f32 0.0, %v801
    %v803 = vpop.f32.mrf.mxu0
    %v804 = vpop.f32.mrf.mxu0
    %v805 = vpop.f32.mrf.mxu0
    %806 = vdwg.mxu0
    %v807 = vcombine.low %v291, %v293
    %v809 = vunpack.c.l.s4 1966171168
    %v810 = vunpack.c.0.s8 %v809
    %v811 = vlaneseq
    %v812 = vshrl.u32 %v811, 7
    %v813 = vsub.s32 %v810, %v812
    %v814 = vrot.slane %v807, %v813
    %v816 = vunpack.c.l.s4 1966171168
    %v817 = vunpack.c.0.s8 %v816
    %v818 = vlaneseq
    %v819 = vshrl.u32 %v818, 7
    %v820 = vsub.s32 %v817, %v819
    %v821 = vrot.slane %v295, %v820
    %v822 = vcombine.low %v814, %v821
    %v824 = vunpack.c.l.s4 1966171168
    %v825 = vunpack.c.0.s8 %v824
    %v826 = vlaneseq
    %v827 = vshrl.u32 %v826, 7
    %v828 = vsub.s32 %v825, %v827
    %v829 = vrot.slane %v822, %v828
    %v831 = vsel %vm415, %v219, 0
    %v834 = vsel %vm415, %v829, 0
    %836 = vmatprep.subr.bf16.mxu0 0
    %837 = vmatpush1.bf16.xpose.msra.mxu0 0
    %838 = vmatprep.subr.bf16.mxu0 0
    %839 = vmatpush1.bf16.xpose.msra.mxu0 0
    %840 = vmatprep.subr.bf16.mxu0 0
    %841 = vmatpush1.bf16.xpose.msra.mxu0 0
    %842 = vmatprep.subr.bf16.mxu0 0
    %843 = vmatpush1.bf16.xpose.msra.mxu0 0
    %844 = vmatprep.subr.bf16.mxu0 0
    %845 = vmatpush1.bf16.xpose.msra.mxu0 0
    %846 = vmatprep.subr.bf16.mxu0 0
    %847 = vmatpush1.bf16.xpose.msra.mxu0 0
    %848 = vmatprep.subr.bf16.mxu0 0
    %849 = vmatpush1.bf16.xpose.msra.mxu0 0
    %850 = vmatprep.subr.bf16.mxu0 0
    %851 = vmatpush1.bf16.xpose.msra.mxu0 %v834
    %852 = vmatprep.subr.bf16.mxu0 0
    %853 = vmatpush2.bf16.xpose.msra.mxu0 0
    %854 = vmatprep.subr.bf16.mxu0 0
    %855 = vmatpush2.bf16.xpose.msra.mxu0 0
    %856 = vmatprep.subr.bf16.mxu0 0
    %857 = vmatpush2.bf16.xpose.msra.mxu0 0
    %858 = vmatprep.subr.bf16.mxu0 0
    %859 = vmatpush2.bf16.xpose.msra.mxu0 0
    %860 = vmatprep.subr.bf16.mxu0 0
    %861 = vmatpush2.bf16.xpose.msra.mxu0 0
    %862 = vmatprep.subr.bf16.mxu0 0
    %863 = vmatpush2.bf16.xpose.msra.mxu0 0
    %864 = vmatprep.subr.bf16.mxu0 0
    %865 = vmatpush2.bf16.xpose.msra.mxu0 0
    %866 = vmatprep.subr.bf16.mxu0 0
    %867 = vmatpush2.bf16.xpose.msra.mxu0 0
    %868 = vmatprep.mubr.bf16.mxu0 0
    %869 = vmatmul.mubr.bf16.gmra.mxu0 %v831
    %v870 = vpop.f32.mrf.mxu0
    %v871 = vadd.f32 0.0, %v870
    %v872 = vpop.f32.mrf.mxu0
    %v873 = vpop.f32.mrf.mxu0
    %v874 = vpop.f32.mrf.mxu0
    %875 = vdwg.mxu0
    %v876 = vcombine.low %v303, %v305
    %v878 = vunpack.c.l.s4 1966171168
    %v879 = vunpack.c.0.s8 %v878
    %v880 = vlaneseq
    %v881 = vshrl.u32 %v880, 7
    %v882 = vsub.s32 %v879, %v881
    %v883 = vrot.slane %v876, %v882
    %v885 = vunpack.c.l.s4 1966171168
    %v886 = vunpack.c.0.s8 %v885
    %v887 = vlaneseq
    %v888 = vshrl.u32 %v887, 7
    %v889 = vsub.s32 %v886, %v888
    %v890 = vrot.slane %v307, %v889
    %v891 = vcombine.low %v883, %v890
    %v893 = vunpack.c.l.s4 1966171168
    %v894 = vunpack.c.0.s8 %v893
    %v895 = vlaneseq
    %v896 = vshrl.u32 %v895, 7
    %v897 = vsub.s32 %v894, %v896
    %v898 = vrot.slane %v891, %v897
    %v900 = vsel %vm415, %v223, 0
    %v903 = vsel %vm415, %v898, 0
    %905 = vmatprep.subr.bf16.mxu0 0
    %906 = vmatpush1.bf16.xpose.msra.mxu0 0
    %907 = vmatprep.subr.bf16.mxu0 0
    %908 = vmatpush1.bf16.xpose.msra.mxu0 0
    %909 = vmatprep.subr.bf16.mxu0 0
    %910 = vmatpush1.bf16.xpose.msra.mxu0 0
    %911 = vmatprep.subr.bf16.mxu0 0
    %912 = vmatpush1.bf16.xpose.msra.mxu0 0
    %913 = vmatprep.subr.bf16.mxu0 0
    %914 = vmatpush1.bf16.xpose.msra.mxu0 0
    %915 = vmatprep.subr.bf16.mxu0 0
    %916 = vmatpush1.bf16.xpose.msra.mxu0 0
    %917 = vmatprep.subr.bf16.mxu0 0
    %918 = vmatpush1.bf16.xpose.msra.mxu0 0
    %919 = vmatprep.subr.bf16.mxu0 0
    %920 = vmatpush1.bf16.xpose.msra.mxu0 %v903
    %921 = vmatprep.subr.bf16.mxu0 0
    %922 = vmatpush2.bf16.xpose.msra.mxu0 0
    %923 = vmatprep.subr.bf16.mxu0 0
    %924 = vmatpush2.bf16.xpose.msra.mxu0 0
    %925 = vmatprep.subr.bf16.mxu0 0
    %926 = vmatpush2.bf16.xpose.msra.mxu0 0
    %927 = vmatprep.subr.bf16.mxu0 0
    %928 = vmatpush2.bf16.xpose.msra.mxu0 0
    %929 = vmatprep.subr.bf16.mxu0 0
    %930 = vmatpush2.bf16.xpose.msra.mxu0 0
    %931 = vmatprep.subr.bf16.mxu0 0
    %932 = vmatpush2.bf16.xpose.msra.mxu0 0
    %933 = vmatprep.subr.bf16.mxu0 0
    %934 = vmatpush2.bf16.xpose.msra.mxu0 0
    %935 = vmatprep.subr.bf16.mxu0 0
    %936 = vmatpush2.bf16.xpose.msra.mxu0 0
    %937 = vmatprep.mubr.bf16.mxu0 0
    %938 = vmatmul.mubr.bf16.gmra.mxu0 %v900
    %v939 = vpop.f32.mrf.mxu0
    %v940 = vadd.f32 0.0, %v939
    %v941 = vpop.f32.mrf.mxu0
    %v942 = vpop.f32.mrf.mxu0
    %v943 = vpop.f32.mrf.mxu0
    %944 = vdwg.mxu0
    %v945 = vlaneseq
    %v946 = vand.u32 %v945, 127
    %v947 = vld [vmem:[%s0] sm:$0x1]
    %v948 = vld [vmem:[%s0 + $0x1] sm:$0x1]
    %v949 = vld [vmem:[%s0 + $0x2] sm:$0x1]
    %v950 = vld [vmem:[%s0 + $0x3] sm:$0x1]
    %v951 = vld [vmem:[%s0 + $0x4] sm:$0x1]
    %v952 = vld [vmem:[%s0 + $0x5] sm:$0x1]
    %v953 = vld [vmem:[%s0 + $0x6] sm:$0x1]
    %v954 = vld [vmem:[%s0 + $0x7] sm:$0x1]
    %v955 = vlaneseq
    %v956 = vshrl.u32 %v955, 7
    %v957 = vsub.s32 0, %v956
    %v958 = vrot.slane %v947, %v957
    %v959 = vlaneseq
    %v960 = vshrl.u32 %v959, 7
    %v961 = vsub.s32 0, %v960
    %v962 = vrot.slane %v948, %v961
    %v963 = vlaneseq
    %v964 = vshrl.u32 %v963, 7
    %v965 = vsub.s32 0, %v964
    %v966 = vrot.slane %v949, %v965
    %v967 = vlaneseq
    %v968 = vshrl.u32 %v967, 7
    %v969 = vsub.s32 0, %v968
    %v970 = vrot.slane %v950, %v969
    %v971 = vlaneseq
    %v972 = vshrl.u32 %v971, 7
    %v973 = vsub.s32 0, %v972
    %v974 = vrot.slane %v951, %v973
    %v975 = vlaneseq
    %v976 = vshrl.u32 %v975, 7
    %v977 = vsub.s32 0, %v976
    %v978 = vrot.slane %v952, %v977
    %v979 = vlaneseq
    %v980 = vshrl.u32 %v979, 7
    %v981 = vsub.s32 0, %v980
    %v982 = vrot.slane %v953, %v981
    %v983 = vlaneseq
    %v984 = vshrl.u32 %v983, 7
    %v985 = vsub.s32 0, %v984
    %v986 = vrot.slane %v954, %v985
    %987 = vset.pattern.permute.xlu0 0
    %988 = vperm.xlu0 %987, %v958
    %v989 = vpop.permute.xlu0 %988
    %990 = vset.pattern.permute.xlu0 0
    %991 = vperm.xlu0 %990, %v962
    %v992 = vpop.permute.xlu0 %991
    %993 = vset.pattern.permute.xlu0 0
    %994 = vperm.xlu0 %993, %v966
    %v995 = vpop.permute.xlu0 %994
    %996 = vset.pattern.permute.xlu0 0
    %997 = vperm.xlu0 %996, %v970
    %v998 = vpop.permute.xlu0 %997
    %999 = vset.pattern.permute.xlu0 0
    %1000 = vperm.xlu0 %999, %v974
    %v1001 = vpop.permute.xlu0 %1000
    %1002 = vset.pattern.permute.xlu0 0
    %1003 = vperm.xlu0 %1002, %v978
    %v1004 = vpop.permute.xlu0 %1003
    %1005 = vset.pattern.permute.xlu0 0
    %1006 = vperm.xlu0 %1005, %v982
    %v1007 = vpop.permute.xlu0 %1006
    %1008 = vset.pattern.permute.xlu0 0
    %1009 = vperm.xlu0 %1008, %v986
    %v1010 = vpop.permute.xlu0 %1009
    %vm1011 = vcmp.lt.s32.totalorder %v946, %v989
    %vm1012 = vcmp.lt.s32.totalorder %v946, %v992
    %vm1013 = vcmp.lt.s32.totalorder %v946, %v995
    %vm1014 = vcmp.lt.s32.totalorder %v946, %v998
    %vm1015 = vcmp.lt.s32.totalorder %v946, %v1001
    %vm1016 = vcmp.lt.s32.totalorder %v946, %v1004
    %vm1017 = vcmp.lt.s32.totalorder %v946, %v1007
    %vm1018 = vcmp.lt.s32.totalorder %v946, %v1010
    %v1019 = vsel %vm1011, %v457, -1000000.0
    %v1020 = vsel %vm1012, %v526, -1000000.0
    %v1021 = vsel %vm1013, %v595, -1000000.0
    %v1022 = vsel %vm1014, %v664, -1000000.0
    %v1023 = vsel %vm1015, %v733, -1000000.0
    %v1024 = vsel %vm1016, %v802, -1000000.0
    %v1025 = vsel %vm1017, %v871, -1000000.0
    %v1026 = vsel %vm1018, %v940, -1000000.0
    %vm1027 = vcmask 44032
    %v1028 = vsel %vm1027, %v1019, -inf
    %1029 = vmax.xlane.f32.xlu0 %v1028
    %v1030 = vpop.xlane.xlu0 %1029
    %v1031 = vsel %vm1027, %v1020, -inf
    %1032 = vmax.xlane.f32.xlu0 %v1031
    %v1033 = vpop.xlane.xlu0 %1032
    %v1034 = vsel %vm1027, %v1021, -inf
    %1035 = vmax.xlane.f32.xlu0 %v1034
    %v1036 = vpop.xlane.xlu0 %1035
    %v1037 = vsel %vm1027, %v1022, -inf
    %1038 = vmax.xlane.f32.xlu0 %v1037
    %v1039 = vpop.xlane.xlu0 %1038
    %v1040 = vsel %vm1027, %v1023, -inf
    %1041 = vmax.xlane.f32.xlu0 %v1040
    %v1042 = vpop.xlane.xlu0 %1041
    %v1043 = vsel %vm1027, %v1024, -inf
    %1044 = vmax.xlane.f32.xlu0 %v1043
    %v1045 = vpop.xlane.xlu0 %1044
    %v1046 = vsel %vm1027, %v1025, -inf
    %1047 = vmax.xlane.f32.xlu0 %v1046
    %v1048 = vpop.xlane.xlu0 %1047
    %v1049 = vsel %vm1027, %v1026, -inf
    %1050 = vmax.xlane.f32.xlu0 %v1049
    %v1051 = vpop.xlane.xlu0 %1050
    %v1052 = vsub.f32 %v1019, %v1030
    %v1053 = vsub.f32 %v1020, %v1033
    %v1054 = vsub.f32 %v1021, %v1036
    %v1055 = vsub.f32 %v1022, %v1039
    %v1056 = vsub.f32 %v1023, %v1042
    %v1057 = vsub.f32 %v1024, %v1045
    %v1058 = vsub.f32 %v1025, %v1048
    %v1059 = vsub.f32 %v1026, %v1051
    %v1060 = vmul.f32 %v1052, 1.442695
    %v1061 = vpow.pop %v1060
    %v1062 = vmul.f32 %v1053, 1.442695
    %v1063 = vpow.pop %v1062
    %v1064 = vmul.f32 %v1054, 1.442695
    %v1065 = vpow.pop %v1064
    %v1066 = vmul.f32 %v1055, 1.442695
    %v1067 = vpow.pop %v1066
    %v1068 = vmul.f32 %v1056, 1.442695
    %v1069 = vpow.pop %v1068
    %v1070 = vmul.f32 %v1057, 1.442695
    %v1071 = vpow.pop %v1070
    %v1072 = vmul.f32 %v1058, 1.442695
    %v1073 = vpow.pop %v1072
    %v1074 = vmul.f32 %v1059, 1.442695
    %v1075 = vpow.pop %v1074
    %v1076 = vsel %vm1027, %v1061, 0.0
    %1077 = vadd.xlane.f32.xlu0 %v1076
    %v1078 = vpop.xlane.xlu0 %1077
    %v1079 = vsel %vm1027, %v1063, 0.0
    %1080 = vadd.xlane.f32.xlu0 %v1079
    %v1081 = vpop.xlane.xlu0 %1080
    %v1082 = vsel %vm1027, %v1065, 0.0
    %1083 = vadd.xlane.f32.xlu0 %v1082
    %v1084 = vpop.xlane.xlu0 %1083
    %v1085 = vsel %vm1027, %v1067, 0.0
    %1086 = vadd.xlane.f32.xlu0 %v1085
    %v1087 = vpop.xlane.xlu0 %1086
    %v1088 = vsel %vm1027, %v1069, 0.0
    %1089 = vadd.xlane.f32.xlu0 %v1088
    %v1090 = vpop.xlane.xlu0 %1089
    %v1091 = vsel %vm1027, %v1071, 0.0
    %1092 = vadd.xlane.f32.xlu0 %v1091
    %v1093 = vpop.xlane.xlu0 %1092
    %v1094 = vsel %vm1027, %v1073, 0.0
    %1095 = vadd.xlane.f32.xlu0 %v1094
    %v1096 = vpop.xlane.xlu0 %1095
    %v1097 = vsel %vm1027, %v1075, 0.0
    %1098 = vadd.xlane.f32.xlu0 %v1097
    %v1099 = vpop.xlane.xlu0 %1098
    %v1100 = vrcp.pop %v1078
    %v1101 = vrcp.pop %v1081
    %v1102 = vrcp.pop %v1084
    %v1103 = vrcp.pop %v1087
    %v1104 = vrcp.pop %v1090
    %v1105 = vrcp.pop %v1093
    %v1106 = vrcp.pop %v1096
    %v1107 = vrcp.pop %v1099
    %v1108 = vmul.f32 %v1061, %v1100
    %v1109 = vmul.f32 %v1063, %v1101
    %v1110 = vmul.f32 %v1065, %v1102
    %v1111 = vmul.f32 %v1067, %v1103
    %v1112 = vmul.f32 %v1069, %v1104
    %v1113 = vmul.f32 %v1071, %v1105
    %v1114 = vmul.f32 %v1073, %v1106
    %v1115 = vmul.f32 %v1075, %v1107
    %v1116 = vpack.c.bf16 %v1108, %v1108
    %v1117 = vpack.c.bf16 %v1109, %v1109
    %v1118 = vpack.c.bf16 %v1110, %v1110
    %v1119 = vpack.c.bf16 %v1111, %v1111
    %v1120 = vpack.c.bf16 %v1112, %v1112
    %v1121 = vpack.c.bf16 %v1113, %v1113
    %v1122 = vpack.c.bf16 %v1114, %v1114
    %v1123 = vpack.c.bf16 %v1115, %v1115
    %v1124 = vcombine.low %v332, %v346
    %v1126 = vunpack.c.l.s4 1966171168
    %v1127 = vunpack.c.0.s8 %v1126
    %v1128 = vlaneseq
    %v1129 = vshrl.u32 %v1128, 7
    %v1130 = vsub.s32 %v1127, %v1129
    %v1131 = vrot.slane %v1124, %v1130
    %v1133 = vunpack.c.l.s4 1966171168
    %v1134 = vunpack.c.0.s8 %v1133
    %v1135 = vlaneseq
    %v1136 = vshrl.u32 %v1135, 7
    %v1137 = vsub.s32 %v1134, %v1136
    %v1138 = vrot.slane %v354, %v1137
    %v1139 = vcombine.low %v1131, %v1138
    %v1141 = vunpack.c.l.s4 1966171168
    %v1142 = vunpack.c.0.s8 %v1141
    %v1143 = vlaneseq
    %v1144 = vshrl.u32 %v1143, 7
    %v1145 = vsub.s32 %v1142, %v1144
    %v1146 = vrot.slane %v1139, %v1145
    %vm1147 = vcmask 48128
    %v1149 = vsel %vm1147, %v1116, 0
    %v1152 = vsel %vm38, %v1146, 0
    %1154 = vmatprep.subr.bf16.mxu0 0
    %1155 = vmatpush1.bf16.msra.mxu0 0
    %1156 = vmatprep.subr.bf16.mxu0 0
    %1157 = vmatpush1.bf16.msra.mxu0 0
    %1158 = vmatprep.subr.bf16.mxu0 0
    %1159 = vmatpush1.bf16.msra.mxu0 0
    %1160 = vmatprep.subr.bf16.mxu0 0
    %1161 = vmatpush1.bf16.msra.mxu0 0
    %1162 = vmatprep.subr.bf16.mxu0 0
    %1163 = vmatpush1.bf16.msra.mxu0 0
    %1164 = vmatprep.subr.bf16.mxu0 0
    %1165 = vmatpush1.bf16.msra.mxu0 0
    %1166 = vmatprep.subr.bf16.mxu0 0
    %1167 = vmatpush1.bf16.msra.mxu0 0
    %1168 = vmatprep.subr.bf16.mxu0 0
    %1169 = vmatpush1.bf16.msra.mxu0 %v1152
    %1170 = vmatprep.subr.bf16.mxu0 0
    %1171 = vmatpush2.bf16.msra.mxu0 0
    %1172 = vmatprep.subr.bf16.mxu0 0
    %1173 = vmatpush2.bf16.msra.mxu0 0
    %1174 = vmatprep.subr.bf16.mxu0 0
    %1175 = vmatpush2.bf16.msra.mxu0 0
    %1176 = vmatprep.subr.bf16.mxu0 0
    %1177 = vmatpush2.bf16.msra.mxu0 0
    %1178 = vmatprep.subr.bf16.mxu0 0
    %1179 = vmatpush2.bf16.msra.mxu0 0
    %1180 = vmatprep.subr.bf16.mxu0 0
    %1181 = vmatpush2.bf16.msra.mxu0 0
    %1182 = vmatprep.subr.bf16.mxu0 0
    %1183 = vmatpush2.bf16.msra.mxu0 0
    %1184 = vmatprep.subr.bf16.mxu0 0
    %1185 = vmatpush2.bf16.msra.mxu0 0
    %1186 = vmatprep.mubr.bf16.mxu0 0
    %1187 = vmatmul.mubr.bf16.gmra.mxu0 %v1149
    %v1188 = vpop.f32.mrf.mxu0
    %v1189 = vadd.f32 0.0, %v1188
    %v1190 = vpop.f32.mrf.mxu0
    %v1191 = vpop.f32.mrf.mxu0
    %v1192 = vpop.f32.mrf.mxu0
    %1193 = vdwg.mxu0
    %v1194 = vcombine.low %v357, %v359
    %v1196 = vunpack.c.l.s4 1966171168
    %v1197 = vunpack.c.0.s8 %v1196
    %v1198 = vlaneseq
    %v1199 = vshrl.u32 %v1198, 7
    %v1200 = vsub.s32 %v1197, %v1199
    %v1201 = vrot.slane %v1194, %v1200
    %v1203 = vunpack.c.l.s4 1966171168
    %v1204 = vunpack.c.0.s8 %v1203
    %v1205 = vlaneseq
    %v1206 = vshrl.u32 %v1205, 7
    %v1207 = vsub.s32 %v1204, %v1206
    %v1208 = vrot.slane %v361, %v1207
    %v1209 = vcombine.low %v1201, %v1208
    %v1211 = vunpack.c.l.s4 1966171168
    %v1212 = vunpack.c.0.s8 %v1211
    %v1213 = vlaneseq
    %v1214 = vshrl.u32 %v1213, 7
    %v1215 = vsub.s32 %v1212, %v1214
    %v1216 = vrot.slane %v1209, %v1215
    %v1218 = vsel %vm1147, %v1117, 0
    %v1221 = vsel %vm38, %v1216, 0
    %1223 = vmatprep.subr.bf16.mxu0 0
    %1224 = vmatpush1.bf16.msra.mxu0 0
    %1225 = vmatprep.subr.bf16.mxu0 0
    %1226 = vmatpush1.bf16.msra.mxu0 0
    %1227 = vmatprep.subr.bf16.mxu0 0
    %1228 = vmatpush1.bf16.msra.mxu0 0
    %1229 = vmatprep.subr.bf16.mxu0 0
    %1230 = vmatpush1.bf16.msra.mxu0 0
    %1231 = vmatprep.subr.bf16.mxu0 0
    %1232 = vmatpush1.bf16.msra.mxu0 0
    %1233 = vmatprep.subr.bf16.mxu0 0
    %1234 = vmatpush1.bf16.msra.mxu0 0
    %1235 = vmatprep.subr.bf16.mxu0 0
    %1236 = vmatpush1.bf16.msra.mxu0 0
    %1237 = vmatprep.subr.bf16.mxu0 0
    %1238 = vmatpush1.bf16.msra.mxu0 %v1221
    %1239 = vmatprep.subr.bf16.mxu0 0
    %1240 = vmatpush2.bf16.msra.mxu0 0
    %1241 = vmatprep.subr.bf16.mxu0 0
    %1242 = vmatpush2.bf16.msra.mxu0 0
    %1243 = vmatprep.subr.bf16.mxu0 0
    %1244 = vmatpush2.bf16.msra.mxu0 0
    %1245 = vmatprep.subr.bf16.mxu0 0
    %1246 = vmatpush2.bf16.msra.mxu0 0
    %1247 = vmatprep.subr.bf16.mxu0 0
    %1248 = vmatpush2.bf16.msra.mxu0 0
    %1249 = vmatprep.subr.bf16.mxu0 0
    %1250 = vmatpush2.bf16.msra.mxu0 0
    %1251 = vmatprep.subr.bf16.mxu0 0
    %1252 = vmatpush2.bf16.msra.mxu0 0
    %1253 = vmatprep.subr.bf16.mxu0 0
    %1254 = vmatpush2.bf16.msra.mxu0 0
    %1255 = vmatprep.mubr.bf16.mxu0 0
    %1256 = vmatmul.mubr.bf16.gmra.mxu0 %v1218
    %v1257 = vpop.f32.mrf.mxu0
    %v1258 = vadd.f32 0.0, %v1257
    %v1259 = vpop.f32.mrf.mxu0
    %v1260 = vpop.f32.mrf.mxu0
    %v1261 = vpop.f32.mrf.mxu0
    %1262 = vdwg.mxu0
    %v1263 = vcombine.low %v369, %v371
    %v1265 = vunpack.c.l.s4 1966171168
    %v1266 = vunpack.c.0.s8 %v1265
    %v1267 = vlaneseq
    %v1268 = vshrl.u32 %v1267, 7
    %v1269 = vsub.s32 %v1266, %v1268
    %v1270 = vrot.slane %v1263, %v1269
    %v1272 = vunpack.c.l.s4 1966171168
    %v1273 = vunpack.c.0.s8 %v1272
    %v1274 = vlaneseq
    %v1275 = vshrl.u32 %v1274, 7
    %v1276 = vsub.s32 %v1273, %v1275
    %v1277 = vrot.slane %v373, %v1276
    %v1278 = vcombine.low %v1270, %v1277
    %v1280 = vunpack.c.l.s4 1966171168
    %v1281 = vunpack.c.0.s8 %v1280
    %v1282 = vlaneseq
    %v1283 = vshrl.u32 %v1282, 7
    %v1284 = vsub.s32 %v1281, %v1283
    %v1285 = vrot.slane %v1278, %v1284
    %v1287 = vsel %vm1147, %v1118, 0
    %v1290 = vsel %vm38, %v1285, 0
    %1292 = vmatprep.subr.bf16.mxu0 0
    %1293 = vmatpush1.bf16.msra.mxu0 0
    %1294 = vmatprep.subr.bf16.mxu0 0
    %1295 = vmatpush1.bf16.msra.mxu0 0
    %1296 = vmatprep.subr.bf16.mxu0 0
    %1297 = vmatpush1.bf16.msra.mxu0 0
    %1298 = vmatprep.subr.bf16.mxu0 0
    %1299 = vmatpush1.bf16.msra.mxu0 0
    %1300 = vmatprep.subr.bf16.mxu0 0
    %1301 = vmatpush1.bf16.msra.mxu0 0
    %1302 = vmatprep.subr.bf16.mxu0 0
    %1303 = vmatpush1.bf16.msra.mxu0 0
    %1304 = vmatprep.subr.bf16.mxu0 0
    %1305 = vmatpush1.bf16.msra.mxu0 0
    %1306 = vmatprep.subr.bf16.mxu0 0
    %1307 = vmatpush1.bf16.msra.mxu0 %v1290
    %1308 = vmatprep.subr.bf16.mxu0 0
    %1309 = vmatpush2.bf16.msra.mxu0 0
    %1310 = vmatprep.subr.bf16.mxu0 0
    %1311 = vmatpush2.bf16.msra.mxu0 0
    %1312 = vmatprep.subr.bf16.mxu0 0
    %1313 = vmatpush2.bf16.msra.mxu0 0
    %1314 = vmatprep.subr.bf16.mxu0 0
    %1315 = vmatpush2.bf16.msra.mxu0 0
    %1316 = vmatprep.subr.bf16.mxu0 0
    %1317 = vmatpush2.bf16.msra.mxu0 0
    %1318 = vmatprep.subr.bf16.mxu0 0
    %1319 = vmatpush2.bf16.msra.mxu0 0
    %1320 = vmatprep.subr.bf16.mxu0 0
    %1321 = vmatpush2.bf16.msra.mxu0 0
    %1322 = vmatprep.subr.bf16.mxu0 0
    %1323 = vmatpush2.bf16.msra.mxu0 0
    %1324 = vmatprep.mubr.bf16.mxu0 0
    %1325 = vmatmul.mubr.bf16.gmra.mxu0 %v1287
    %v1326 = vpop.f32.mrf.mxu0
    %v1327 = vadd.f32 0.0, %v1326
    %v1328 = vpop.f32.mrf.mxu0
    %v1329 = vpop.f32.mrf.mxu0
    %v1330 = vpop.f32.mrf.mxu0
    %1331 = vdwg.mxu0
    %v1332 = vcombine.low %v381, %v383
    %v1334 = vunpack.c.l.s4 1966171168
    %v1335 = vunpack.c.0.s8 %v1334
    %v1336 = vlaneseq
    %v1337 = vshrl.u32 %v1336, 7
    %v1338 = vsub.s32 %v1335, %v1337
    %v1339 = vrot.slane %v1332, %v1338
    %v1341 = vunpack.c.l.s4 1966171168
    %v1342 = vunpack.c.0.s8 %v1341
    %v1343 = vlaneseq
    %v1344 = vshrl.u32 %v1343, 7
    %v1345 = vsub.s32 %v1342, %v1344
    %v1346 = vrot.slane %v385, %v1345
    %v1347 = vcombine.low %v1339, %v1346
    %v1349 = vunpack.c.l.s4 1966171168
    %v1350 = vunpack.c.0.s8 %v1349
    %v1351 = vlaneseq
    %v1352 = vshrl.u32 %v1351, 7
    %v1353 = vsub.s32 %v1350, %v1352
    %v1354 = vrot.slane %v1347, %v1353
    %v1356 = vsel %vm1147, %v1119, 0
    %v1359 = vsel %vm38, %v1354, 0
    %1361 = vmatprep.subr.bf16.mxu0 0
    %1362 = vmatpush1.bf16.msra.mxu0 0
    %1363 = vmatprep.subr.bf16.mxu0 0
    %1364 = vmatpush1.bf16.msra.mxu0 0
    %1365 = vmatprep.subr.bf16.mxu0 0
    %1366 = vmatpush1.bf16.msra.mxu0 0
    %1367 = vmatprep.subr.bf16.mxu0 0
    %1368 = vmatpush1.bf16.msra.mxu0 0
    %1369 = vmatprep.subr.bf16.mxu0 0
    %1370 = vmatpush1.bf16.msra.mxu0 0
    %1371 = vmatprep.subr.bf16.mxu0 0
    %1372 = vmatpush1.bf16.msra.mxu0 0
    %1373 = vmatprep.subr.bf16.mxu0 0
    %1374 = vmatpush1.bf16.msra.mxu0 0
    %1375 = vmatprep.subr.bf16.mxu0 0
    %1376 = vmatpush1.bf16.msra.mxu0 %v1359
    %1377 = vmatprep.subr.bf16.mxu0 0
    %1378 = vmatpush2.bf16.msra.mxu0 0
    %1379 = vmatprep.subr.bf16.mxu0 0
    %1380 = vmatpush2.bf16.msra.mxu0 0
    %1381 = vmatprep.subr.bf16.mxu0 0
    %1382 = vmatpush2.bf16.msra.mxu0 0
    %1383 = vmatprep.subr.bf16.mxu0 0
    %1384 = vmatpush2.bf16.msra.mxu0 0
    %1385 = vmatprep.subr.bf16.mxu0 0
    %1386 = vmatpush2.bf16.msra.mxu0 0
    %1387 = vmatprep.subr.bf16.mxu0 0
    %1388 = vmatpush2.bf16.msra.mxu0 0
    %1389 = vmatprep.subr.bf16.mxu0 0
    %1390 = vmatpush2.bf16.msra.mxu0 0
    %1391 = vmatprep.subr.bf16.mxu0 0
    %1392 = vmatpush2.bf16.msra.mxu0 0
    %1393 = vmatprep.mubr.bf16.mxu0 0
    %1394 = vmatmul.mubr.bf16.gmra.mxu0 %v1356
    %v1395 = vpop.f32.mrf.mxu0
    %v1396 = vadd.f32 0.0, %v1395
    %v1397 = vpop.f32.mrf.mxu0
    %v1398 = vpop.f32.mrf.mxu0
    %v1399 = vpop.f32.mrf.mxu0
    %1400 = vdwg.mxu0
    %v1401 = vcombine.low %v355, %v339
    %v1403 = vunpack.c.l.s4 1966171168
    %v1404 = vunpack.c.0.s8 %v1403
    %v1405 = vlaneseq
    %v1406 = vshrl.u32 %v1405, 7
    %v1407 = vsub.s32 %v1404, %v1406
    %v1408 = vrot.slane %v1401, %v1407
    %v1410 = vunpack.c.l.s4 1966171168
    %v1411 = vunpack.c.0.s8 %v1410
    %v1412 = vlaneseq
    %v1413 = vshrl.u32 %v1412, 7
    %v1414 = vsub.s32 %v1411, %v1413
    %v1415 = vrot.slane %v353, %v1414
    %v1416 = vcombine.low %v1408, %v1415
    %v1418 = vunpack.c.l.s4 1966171168
    %v1419 = vunpack.c.0.s8 %v1418
    %v1420 = vlaneseq
    %v1421 = vshrl.u32 %v1420, 7
    %v1422 = vsub.s32 %v1419, %v1421
    %v1423 = vrot.slane %v1416, %v1422
    %v1425 = vsel %vm1147, %v1120, 0
    %v1428 = vsel %vm38, %v1423, 0
    %1430 = vmatprep.subr.bf16.mxu0 0
    %1431 = vmatpush1.bf16.msra.mxu0 0
    %1432 = vmatprep.subr.bf16.mxu0 0
    %1433 = vmatpush1.bf16.msra.mxu0 0
    %1434 = vmatprep.subr.bf16.mxu0 0
    %1435 = vmatpush1.bf16.msra.mxu0 0
    %1436 = vmatprep.subr.bf16.mxu0 0
    %1437 = vmatpush1.bf16.msra.mxu0 0
    %1438 = vmatprep.subr.bf16.mxu0 0
    %1439 = vmatpush1.bf16.msra.mxu0 0
    %1440 = vmatprep.subr.bf16.mxu0 0
    %1441 = vmatpush1.bf16.msra.mxu0 0
    %1442 = vmatprep.subr.bf16.mxu0 0
    %1443 = vmatpush1.bf16.msra.mxu0 0
    %1444 = vmatprep.subr.bf16.mxu0 0
    %1445 = vmatpush1.bf16.msra.mxu0 %v1428
    %1446 = vmatprep.subr.bf16.mxu0 0
    %1447 = vmatpush2.bf16.msra.mxu0 0
    %1448 = vmatprep.subr.bf16.mxu0 0
    %1449 = vmatpush2.bf16.msra.mxu0 0
    %1450 = vmatprep.subr.bf16.mxu0 0
    %1451 = vmatpush2.bf16.msra.mxu0 0
    %1452 = vmatprep.subr.bf16.mxu0 0
    %1453 = vmatpush2.bf16.msra.mxu0 0
    %1454 = vmatprep.subr.bf16.mxu0 0
    %1455 = vmatpush2.bf16.msra.mxu0 0
    %1456 = vmatprep.subr.bf16.mxu0 0
    %1457 = vmatpush2.bf16.msra.mxu0 0
    %1458 = vmatprep.subr.bf16.mxu0 0
    %1459 = vmatpush2.bf16.msra.mxu0 0
    %1460 = vmatprep.subr.bf16.mxu0 0
    %1461 = vmatpush2.bf16.msra.mxu0 0
    %1462 = vmatprep.mubr.bf16.mxu0 0
    %1463 = vmatmul.mubr.bf16.gmra.mxu0 %v1425
    %v1464 = vpop.f32.mrf.mxu0
    %v1465 = vadd.f32 0.0, %v1464
    %v1466 = vpop.f32.mrf.mxu0
    %v1467 = vpop.f32.mrf.mxu0
    %v1468 = vpop.f32.mrf.mxu0
    %1469 = vdwg.mxu0
    %v1470 = vcombine.low %v363, %v365
    %v1472 = vunpack.c.l.s4 1966171168
    %v1473 = vunpack.c.0.s8 %v1472
    %v1474 = vlaneseq
    %v1475 = vshrl.u32 %v1474, 7
    %v1476 = vsub.s32 %v1473, %v1475
    %v1477 = vrot.slane %v1470, %v1476
    %v1479 = vunpack.c.l.s4 1966171168
    %v1480 = vunpack.c.0.s8 %v1479
    %v1481 = vlaneseq
    %v1482 = vshrl.u32 %v1481, 7
    %v1483 = vsub.s32 %v1480, %v1482
    %v1484 = vrot.slane %v367, %v1483
    %v1485 = vcombine.low %v1477, %v1484
    %v1487 = vunpack.c.l.s4 1966171168
    %v1488 = vunpack.c.0.s8 %v1487
    %v1489 = vlaneseq
    %v1490 = vshrl.u32 %v1489, 7
    %v1491 = vsub.s32 %v1488, %v1490
    %v1492 = vrot.slane %v1485, %v1491
    %v1494 = vsel %vm1147, %v1121, 0
    %v1497 = vsel %vm38, %v1492, 0
    %1499 = vmatprep.subr.bf16.mxu0 0
    %1500 = vmatpush1.bf16.msra.mxu0 0
    %1501 = vmatprep.subr.bf16.mxu0 0
    %1502 = vmatpush1.bf16.msra.mxu0 0
    %1503 = vmatprep.subr.bf16.mxu0 0
    %1504 = vmatpush1.bf16.msra.mxu0 0
    %1505 = vmatprep.subr.bf16.mxu0 0
    %1506 = vmatpush1.bf16.msra.mxu0 0
    %1507 = vmatprep.subr.bf16.mxu0 0
    %1508 = vmatpush1.bf16.msra.mxu0 0
    %1509 = vmatprep.subr.bf16.mxu0 0
    %1510 = vmatpush1.bf16.msra.mxu0 0
    %1511 = vmatprep.subr.bf16.mxu0 0
    %1512 = vmatpush1.bf16.msra.mxu0 0
    %1513 = vmatprep.subr.bf16.mxu0 0
    %1514 = vmatpush1.bf16.msra.mxu0 %v1497
    %1515 = vmatprep.subr.bf16.mxu0 0
    %1516 = vmatpush2.bf16.msra.mxu0 0
    %1517 = vmatprep.subr.bf16.mxu0 0
    %1518 = vmatpush2.bf16.msra.mxu0 0
    %1519 = vmatprep.subr.bf16.mxu0 0
    %1520 = vmatpush2.bf16.msra.mxu0 0
    %1521 = vmatprep.subr.bf16.mxu0 0
    %1522 = vmatpush2.bf16.msra.mxu0 0
    %1523 = vmatprep.subr.bf16.mxu0 0
    %1524 = vmatpush2.bf16.msra.mxu0 0
    %1525 = vmatprep.subr.bf16.mxu0 0
    %1526 = vmatpush2.bf16.msra.mxu0 0
    %1527 = vmatprep.subr.bf16.mxu0 0
    %1528 = vmatpush2.bf16.msra.mxu0 0
    %1529 = vmatprep.subr.bf16.mxu0 0
    %1530 = vmatpush2.bf16.msra.mxu0 0
    %1531 = vmatprep.mubr.bf16.mxu0 0
    %1532 = vmatmul.mubr.bf16.gmra.mxu0 %v1494
    %v1533 = vpop.f32.mrf.mxu0
    %v1534 = vadd.f32 0.0, %v1533
    %v1535 = vpop.f32.mrf.mxu0
    %v1536 = vpop.f32.mrf.mxu0
    %v1537 = vpop.f32.mrf.mxu0
    %1538 = vdwg.mxu0
    %v1539 = vcombine.low %v375, %v377
    %v1541 = vunpack.c.l.s4 1966171168
    %v1542 = vunpack.c.0.s8 %v1541
    %v1543 = vlaneseq
    %v1544 = vshrl.u32 %v1543, 7
    %v1545 = vsub.s32 %v1542, %v1544
    %v1546 = vrot.slane %v1539, %v1545
    %v1548 = vunpack.c.l.s4 1966171168
    %v1549 = vunpack.c.0.s8 %v1548
    %v1550 = vlaneseq
    %v1551 = vshrl.u32 %v1550, 7
    %v1552 = vsub.s32 %v1549, %v1551
    %v1553 = vrot.slane %v379, %v1552
    %v1554 = vcombine.low %v1546, %v1553
    %v1556 = vunpack.c.l.s4 1966171168
    %v1557 = vunpack.c.0.s8 %v1556
    %v1558 = vlaneseq
    %v1559 = vshrl.u32 %v1558, 7
    %v1560 = vsub.s32 %v1557, %v1559
    %v1561 = vrot.slane %v1554, %v1560
    %v1563 = vsel %vm1147, %v1122, 0
    %v1566 = vsel %vm38, %v1561, 0
    %1568 = vmatprep.subr.bf16.mxu0 0
    %1569 = vmatpush1.bf16.msra.mxu0 0
    %1570 = vmatprep.subr.bf16.mxu0 0
    %1571 = vmatpush1.bf16.msra.mxu0 0
    %1572 = vmatprep.subr.bf16.mxu0 0
    %1573 = vmatpush1.bf16.msra.mxu0 0
    %1574 = vmatprep.subr.bf16.mxu0 0
    %1575 = vmatpush1.bf16.msra.mxu0 0
    %1576 = vmatprep.subr.bf16.mxu0 0
    %1577 = vmatpush1.bf16.msra.mxu0 0
    %1578 = vmatprep.subr.bf16.mxu0 0
    %1579 = vmatpush1.bf16.msra.mxu0 0
    %1580 = vmatprep.subr.bf16.mxu0 0
    %1581 = vmatpush1.bf16.msra.mxu0 0
    %1582 = vmatprep.subr.bf16.mxu0 0
    %1583 = vmatpush1.bf16.msra.mxu0 %v1566
    %1584 = vmatprep.subr.bf16.mxu0 0
    %1585 = vmatpush2.bf16.msra.mxu0 0
    %1586 = vmatprep.subr.bf16.mxu0 0
    %1587 = vmatpush2.bf16.msra.mxu0 0
    %1588 = vmatprep.subr.bf16.mxu0 0
    %1589 = vmatpush2.bf16.msra.mxu0 0
    %1590 = vmatprep.subr.bf16.mxu0 0
    %1591 = vmatpush2.bf16.msra.mxu0 0
    %1592 = vmatprep.subr.bf16.mxu0 0
    %1593 = vmatpush2.bf16.msra.mxu0 0
    %1594 = vmatprep.subr.bf16.mxu0 0
    %1595 = vmatpush2.bf16.msra.mxu0 0
    %1596 = vmatprep.subr.bf16.mxu0 0
    %1597 = vmatpush2.bf16.msra.mxu0 0
    %1598 = vmatprep.subr.bf16.mxu0 0
    %1599 = vmatpush2.bf16.msra.mxu0 0
    %1600 = vmatprep.mubr.bf16.mxu0 0
    %1601 = vmatmul.mubr.bf16.gmra.mxu0 %v1563
    %v1602 = vpop.f32.mrf.mxu0
    %v1603 = vadd.f32 0.0, %v1602
    %v1604 = vpop.f32.mrf.mxu0
    %v1605 = vpop.f32.mrf.mxu0
    %v1606 = vpop.f32.mrf.mxu0
    %1607 = vdwg.mxu0
    %v1608 = vcombine.low %v387, %v389
    %v1610 = vunpack.c.l.s4 1966171168
    %v1611 = vunpack.c.0.s8 %v1610
    %v1612 = vlaneseq
    %v1613 = vshrl.u32 %v1612, 7
    %v1614 = vsub.s32 %v1611, %v1613
    %v1615 = vrot.slane %v1608, %v1614
    %v1617 = vunpack.c.l.s4 1966171168
    %v1618 = vunpack.c.0.s8 %v1617
    %v1619 = vlaneseq
    %v1620 = vshrl.u32 %v1619, 7
    %v1621 = vsub.s32 %v1618, %v1620
    %v1622 = vrot.slane %v391, %v1621
    %v1623 = vcombine.low %v1615, %v1622
    %v1625 = vunpack.c.l.s4 1966171168
    %v1626 = vunpack.c.0.s8 %v1625
    %v1627 = vlaneseq
    %v1628 = vshrl.u32 %v1627, 7
    %v1629 = vsub.s32 %v1626, %v1628
    %v1630 = vrot.slane %v1623, %v1629
    %v1632 = vsel %vm1147, %v1123, 0
    %v1635 = vsel %vm38, %v1630, 0
    %1637 = vmatprep.subr.bf16.mxu0 0
    %1638 = vmatpush1.bf16.msra.mxu0 0
    %1639 = vmatprep.subr.bf16.mxu0 0
    %1640 = vmatpush1.bf16.msra.mxu0 0
    %1641 = vmatprep.subr.bf16.mxu0 0
    %1642 = vmatpush1.bf16.msra.mxu0 0
    %1643 = vmatprep.subr.bf16.mxu0 0
    %1644 = vmatpush1.bf16.msra.mxu0 0
    %1645 = vmatprep.subr.bf16.mxu0 0
    %1646 = vmatpush1.bf16.msra.mxu0 0
    %1647 = vmatprep.subr.bf16.mxu0 0
    %1648 = vmatpush1.bf16.msra.mxu0 0
    %1649 = vmatprep.subr.bf16.mxu0 0
    %1650 = vmatpush1.bf16.msra.mxu0 0
    %1651 = vmatprep.subr.bf16.mxu0 0
    %1652 = vmatpush1.bf16.msra.mxu0 %v1635
    %1653 = vmatprep.subr.bf16.mxu0 0
    %1654 = vmatpush2.bf16.msra.mxu0 0
    %1655 = vmatprep.subr.bf16.mxu0 0
    %1656 = vmatpush2.bf16.msra.mxu0 0
    %1657 = vmatprep.subr.bf16.mxu0 0
    %1658 = vmatpush2.bf16.msra.mxu0 0
    %1659 = vmatprep.subr.bf16.mxu0 0
    %1660 = vmatpush2.bf16.msra.mxu0 0
    %1661 = vmatprep.subr.bf16.mxu0 0
    %1662 = vmatpush2.bf16.msra.mxu0 0
    %1663 = vmatprep.subr.bf16.mxu0 0
    %1664 = vmatpush2.bf16.msra.mxu0 0
    %1665 = vmatprep.subr.bf16.mxu0 0
    %1666 = vmatpush2.bf16.msra.mxu0 0
    %1667 = vmatprep.subr.bf16.mxu0 0
    %1668 = vmatpush2.bf16.msra.mxu0 0
    %1669 = vmatprep.mubr.bf16.mxu0 0
    %1670 = vmatmul.mubr.bf16.gmra.mxu0 %v1632
    %v1671 = vpop.f32.mrf.mxu0
    %v1672 = vadd.f32 0.0, %v1671
    %v1673 = vpop.f32.mrf.mxu0
    %v1674 = vpop.f32.mrf.mxu0
    %v1675 = vpop.f32.mrf.mxu0
    %1676 = vdwg.mxu0
    %v1679 = vcombine.low %v1189, %v1465
    %v1681 = vpack.c.bf16 %v1679, %v1679
    %vm1682 = vcmask 60416
    %1683 = vst.msk [vmem:[#allocation2] sm:$0xf] %vm1682, %v1681
    %v1686 = vcombine.low %v1258, %v1534
    %v1688 = vpack.c.bf16 %v1686, %v1686
    %v1690 = vunpack.c.l.b16 %v1688
    %v1691 = vpack.c.b16 %v1690, %v1690
    %1692 = vrot.lane.b32.xlu0 %v1691, 8
    %v1693 = vpop.permute.xlu0 %1692
    %vm1695 = vcmask 126016
    %1696 = vst.msk [vmem:[#allocation2] sm:$0xf] %vm1695, %v1693
    %v1699 = vcombine.low %v1327, %v1603
    %v1701 = vpack.c.bf16 %v1699, %v1699
    %v1703 = vunpack.c.l.b16 %v1701
    %v1704 = vpack.c.b16 %v1703, %v1703
    %1705 = vrot.lane.b32.xlu0 %v1704, 16
    %v1706 = vpop.permute.xlu0 %1705
    %vm1708 = vcmask 191616
    %1709 = vst.msk [vmem:[#allocation2] sm:$0xf] %vm1708, %v1706
    %v1712 = vcombine.low %v1396, %v1672
    %v1714 = vpack.c.bf16 %v1712, %v1712
    %v1716 = vunpack.c.l.b16 %v1714
    %v1717 = vpack.c.b16 %v1716, %v1716
    %1718 = vrot.lane.b32.xlu0 %v1717, 24
    %v1719 = vpop.permute.xlu0 %1718
    %vm1721 = vcmask 257216
    %1722 = vst.msk [vmem:[#allocation2] sm:$0xf] %vm1721, %v1719
    %v1723 = vld [vmem:[#allocation2] sm:$0xf]
    %v1724 = vld [vmem:[%s7] sm:$0xf]
    %v1725 = vld [vmem:[%s7 + $0x4] sm:$0xf]
    %v1726 = vld [vmem:[%s7 + $0x8] sm:$0xf]
    %v1727 = vld [vmem:[%s7 + $0xc] sm:$0xf]
    %v1732 = vunpack.c.l.b16 %v1724
    %v1733 = vunpack.c.l.b16 %v1725
    %v1734 = vunpack.c.l.b16 %v1726
    %v1735 = vunpack.c.l.b16 %v1727
    %v1736 = vpack.c.b16 %v1733, %v1732
    %v1737 = vpack.c.b16 %v1735, %v1734
    %vm1740 = vcmask 261120
    %v1742 = vsel %vm1740, %v1723, 0
    %1744 = vmatprep.subr.bf16.mxu0 0
    %1745 = vmatpush1.bf16.msra.mxu0 0
    %1746 = vmatprep.subr.bf16.mxu0 0
    %1747 = vmatpush1.bf16.msra.mxu0 0
    %1748 = vmatprep.subr.bf16.mxu0 0
    %1749 = vmatpush1.bf16.msra.mxu0 0
    %1750 = vmatprep.subr.bf16.mxu0 0
    %1751 = vmatpush1.bf16.msra.mxu0 0
    %1752 = vmatprep.subr.bf16.mxu0 0
    %1753 = vmatpush1.bf16.msra.mxu0 0
    %1754 = vmatprep.subr.bf16.mxu0 0
    %1755 = vmatpush1.bf16.msra.mxu0 0
    %1756 = vmatprep.subr.bf16.mxu0 0
    %1757 = vmatpush1.bf16.msra.mxu0 %v1737
    %1758 = vmatprep.subr.bf16.mxu0 0
    %1759 = vmatpush1.bf16.msra.mxu0 %v1736
    %1760 = vmatprep.subr.bf16.mxu0 0
    %1761 = vmatpush2.bf16.msra.mxu0 0
    %1762 = vmatprep.subr.bf16.mxu0 0
    %1763 = vmatpush2.bf16.msra.mxu0 0
    %1764 = vmatprep.subr.bf16.mxu0 0
    %1765 = vmatpush2.bf16.msra.mxu0 0
    %1766 = vmatprep.subr.bf16.mxu0 0
    %1767 = vmatpush2.bf16.msra.mxu0 0
    %1768 = vmatprep.subr.bf16.mxu0 0
    %1769 = vmatpush2.bf16.msra.mxu0 0
    %1770 = vmatprep.subr.bf16.mxu0 0
    %1771 = vmatpush2.bf16.msra.mxu0 0
    %1772 = vmatprep.subr.bf16.mxu0 0
    %1773 = vmatpush2.bf16.msra.mxu0 0
    %1774 = vmatprep.subr.bf16.mxu0 0
    %1775 = vmatpush2.bf16.msra.mxu0 0
    %1776 = vmatprep.mubr.bf16.mxu0 0
    %1777 = vmatmul.mubr.bf16.gmra.mxu0 %v1742
    %v1778 = vpop.f32.mrf.mxu0
    %v1779 = vadd.f32 0.0, %v1778
    %v1780 = vpop.f32.mrf.mxu0
    %v1781 = vpop.f32.mrf.mxu0
    %v1782 = vpop.f32.mrf.mxu0
    %1783 = vdwg.mxu0
    %1784 = vst.msk [vmem:[#allocation3] sm:$0xff] %vm1740, %v1779
    // Predicated region
    $region34: #{tpu_custom_call.1} parent=1 // pred_check
      _
    $region35: #{tpu_custom_call.1} parent=1 // pred_check_branch
      %1786 = sbr.rel (0) target = $region37
    $region36: #{tpu_custom_call.1} parent=1 // pred_region
      %s1788 = ssub.s32 128, 128
      %1789 = vsyncadd [#allocation4], %s1788
      %s1791 = sshll.u32 [#allocation3], 4
      %s1792 = int_to_ptr.vmem [resolvable:$true] %s1791
      %1794 = dma.vmem_to_hbm [thread:$0]  %s1792, 128, %s8, [#allocation4]
    $region37: #{tpu_custom_call.1} parent=1 // pred_fallthru
      _
    // Predicated region
    $region38: #{tpu_custom_call.1} parent=1 // pred_check
      _
    $region39: #{tpu_custom_call.1} parent=1 // pred_check_branch
      %1796 = sbr.rel (0) target = $region41
    $region40: #{tpu_custom_call.1} parent=1 // pred_region
      %1797 = dma.done [#allocation4], 128
    $region41: #{tpu_custom_call.1} parent=1 // pred_fallthru
      _
    %1798 = vsyncpa [#allocation4], 1

</llo_original>
